<compile_context>
chip_gen: v7x
topology: tpu7x:2x2x1
jax: 0.10.0
libtpu: 0.0.40
codegen_flags: <defaults>
</compile_context>

<pallas_src>
import jax
import jax.numpy as jnp
from jax import lax
from jax.experimental import pallas as pl
from jax.experimental.pallas import tpu as pltpu

# dimension_numbers for "A (M,K) contracted with B (N,K) on K" -> (M,N)
_NT_DIM_NUMBERS = (((1,), (1,)), ((), ()))


def _disc_kernel(x_ref, w1_ref, b1_ref, w2_ref, b2_ref, w3_ref, b3_ref, out_ref):
    # Layer 1: MXU matmul in the weights' dtype (bf16 path stays bf16),
    # f32 accumulation; bias + ReLU in f32 on the VPU.
    h = jnp.dot(x_ref[...].astype(w1_ref.dtype), w1_ref[...],
                preferred_element_type=jnp.float32)
    h = jnp.maximum(h + b1_ref[...].astype(jnp.float32), 0.0)

    # Layer 2: downcast activations to the weight dtype (no-op for f32),
    # accumulate in f32.
    h = jnp.dot(h.astype(w2_ref.dtype), w2_ref[...],
                preferred_element_type=jnp.float32)
    h = jnp.maximum(h + b2_ref[...].astype(jnp.float32), 0.0)

    # Head (out_features == 1): produce a lane-dense (1, tb) row instead of a
    # (tb, 1) column.  w3_row (1, H) contracted with h (tb, H) on the feature
    # dim -> (1, tb); M=1 MXU pass, result already lane-major for the store.
    d = lax.dot_general(w3_ref[...].astype(jnp.float32), h,
                        dimension_numbers=_NT_DIM_NUMBERS,
                        preferred_element_type=jnp.float32)
    d = d + b3_ref[0, 0]                       # scalar bias from SMEM
    out_ref[...] = d.reshape(out_ref.shape).astype(out_ref.dtype)


def _round_up(x, m):
    return (x + m - 1) // m * m


def discriminator_forward(x, params, *, tile_batch=4096):
    """Fused DiscriminatorNN forward.

    params = (w1, b1, w2, b2, w3, b3); weights stored as (in_features,
    out_features) so the kernel computes x @ W + b (equivalent to PyTorch's
    x @ W.T), biases stored as (1, out_features).
    """
    w1, b1, w2, b2, w3, b3 = params
    batch, num_state = x.shape
    h1 = w1.shape[1]
    h2 = w2.shape[1]
    assert w3.shape == (h2, 1), "disc_linear always has out_features == 1"
    out_dtype = x.dtype

    # Stream x at the weight dtype when the weights are narrower (bf16 halves
    # the dominant x HBM stream and feeds the MXU at full bf16 rate).
    if jnp.dtype(w1.dtype).itemsize < jnp.dtype(x.dtype).itemsize:
        x = x.astype(w1.dtype)

    w3_row = w3.reshape(1, h2)                     # head weights as a row
    b3_smem = b3.reshape(1, 1).astype(jnp.float32)  # scalar bias -> SMEM (f32)

    weight_bytes = sum(int(a.size) * jnp.dtype(a.dtype).itemsize
                       for a in (w1, b1, w2, b2, w3_row))
    sx = jnp.dtype(x.dtype).itemsize
    so = jnp.dtype(out_dtype).itemsize
    sw2 = jnp.dtype(w2.dtype).itemsize

    def vmem_needed(tb):
        return (
            2 * tb * num_state * sx        # x tile (double-buffered stream)
            + 2 * tb * so                  # (1, tb) output row (double-buffered)
            + 2 * weight_bytes             # constant blocks still get 2 buffers
            + tb * h1 * 4 + tb * h2 * 4    # f32 h1 / h2 intermediates
            + tb * h1 * sw2                # h1 cast copy feeding the layer-2 dot
        )

    VMEM_BUDGET = 40 * 1024 * 1024   # headroom under v7x's 64 MiB physical VMEM

    # Batch tile: as large as useful (default 4096, multiple of 256 so the MXU
    # M dim fills 256-wide passes on v6e/v7x), multiple of 8 sublanes, never
    # larger than the padded batch, shrunk until the VMEM estimate fits.
    tb = min(tile_batch, _round_up(batch, 8))
    tb = _round_up(tb, 8)
    while tb > 256 and vmem_needed(tb) > VMEM_BUDGET:
        tb = max(256, _round_up(tb // 2, 256))

    padded = _round_up(batch, tb)
    num_tiles = padded // tb
    x_p = x if padded == batch else jnp.pad(x, ((0, padded - batch), (0, 0)))

    needed = vmem_needed(tb)
    cp_kwargs = dict(dimension_semantics=("parallel",))
    if needed > 12 * 1024 * 1024:
        cp_kwargs["vmem_limit_bytes"] = min(needed + 4 * 1024 * 1024,
                                            48 * 1024 * 1024)

    out = pl.pallas_call(
        _disc_kernel,
        out_shape=jax.ShapeDtypeStruct((num_tiles, 1, tb), out_dtype),
        grid=(num_tiles,),
        in_specs=[
            pl.BlockSpec((tb, num_state), lambda i: (i, 0)),   # x: streamed
            pl.BlockSpec((num_state, h1), lambda i: (0, 0)),   # w1: VMEM-resident
            pl.BlockSpec((1, h1), lambda i: (0, 0)),           # b1
            pl.BlockSpec((h1, h2), lambda i: (0, 0)),          # w2
            pl.BlockSpec((1, h2), lambda i: (0, 0)),           # b2
            pl.BlockSpec((1, h2), lambda i: (0, 0)),           # w3 row
            pl.BlockSpec(memory_space=pltpu.MemorySpace.SMEM), # b3 scalar
        ],
        out_specs=pl.BlockSpec((1, 1, tb), lambda i: (i, 0, 0)),  # lane-dense row
        compiler_params=pltpu.CompilerParams(**cp_kwargs),
    )(x_p, w1, b1, w2, b2, w3_row, b3_smem)

    d = out.reshape(padded, 1)
    return d[:batch] if padded != batch else d


def init_params(key, num_state, hidden_dims, num_output=1, dtype=jnp.float32):
    """Deterministic synthetic init (PyTorch-style uniform(-1/sqrt(fan_in)))."""
    dims = [num_state] + list(hidden_dims) + [num_output]
    params = []
    for i in range(len(dims) - 1):
        fan_in, fan_out = dims[i], dims[i + 1]
        key, kw, kb = jax.random.split(key, 3)
        bound = 1.0 / jnp.sqrt(jnp.asarray(fan_in, dtype))
        w = jax.random.uniform(kw, (fan_in, fan_out), dtype, -bound, bound)
        b = jax.random.uniform(kb, (1, fan_out), dtype, -bound, bound)
        params.extend([w, b])
    return tuple(params)


def _reference_forward(x, params):
    w1, b1, w2, b2, w3, b3 = params
    h = jnp.maximum(x @ w1 + b1, 0.0)
    h = jnp.maximum(h @ w2 + b2, 0.0)
    return h @ w3 + b3


if __name__ == "__main__":
    # Shapes consistent with the module defaults (hidden_dims=[512, 256]),
    # small batches for the smoke test.
    num_state = 32
    hidden_dims = [512, 256]

    key = jax.random.PRNGKey(0)
    key, kx1, kx2, kx3 = jax.random.split(key, 4)
    params = init_params(key, num_state, hidden_dims)

    # Case 1: batch fits in one tile (default large tile_batch path).
    x1 = jax.random.normal(kx1, (256, num_state), jnp.float32)
    d1 = jax.block_until_ready(discriminator_forward(x1, params))
    d1_ref = _reference_forward(x1, params)
    assert d1.shape == (256, 1)
    assert jnp.allclose(d1, d1_ref, atol=1e-4, rtol=1e-4)

    # Case 2: ragged batch + multi-tile grid (pad-to-tile, streamed x, resident
    # weights, lane-dense per-step output rows).
    x2 = jax.random.normal(kx2, (300, num_state), jnp.float32)
    d2 = jax.block_until_ready(discriminator_forward(x2, params, tile_batch=128))
    d2_ref = _reference_forward(x2, params)
    assert d2.shape == (300, 1)
    assert jnp.allclose(d2, d2_ref, atol=1e-4, rtol=1e-4)

    # Case 3: bf16 weights -> x is streamed and fed to the MXU in bf16
    # (f32 accumulation), multi-tile grid.
    params_bf16 = tuple(p.astype(jnp.bfloat16) for p in params)
    x3 = jax.random.normal(kx3, (256, num_state), jnp.float32)
    d3 = jax.block_until_ready(discriminator_forward(x3, params_bf16, tile_batch=128))
    d3_ref = _reference_forward(
        x3.astype(jnp.bfloat16).astype(jnp.float32),
        tuple(p.astype(jnp.float32) for p in params_bf16))
    assert d3.shape == (256, 1)
    assert jnp.allclose(d3.astype(jnp.float32), d3_ref, atol=1e-1, rtol=1e-1)

    print("KERNEL_OK")
</pallas_src>

<mosaic_0001>
module attributes {stable_mosaic.version = 11 : i64} {
  func.func @_disc_kernel(%arg0: i32, %arg1: memref<256x32xf32, #tpu.memory_space<vmem>>, %arg2: memref<32x512xf32, #tpu.memory_space<vmem>>, %arg3: memref<1x512xf32, #tpu.memory_space<vmem>>, %arg4: memref<512x256xf32, #tpu.memory_space<vmem>>, %arg5: memref<1x256xf32, #tpu.memory_space<vmem>>, %arg6: memref<1x256xf32, #tpu.memory_space<vmem>>, %arg7: memref<1x1xf32, #tpu.memory_space<smem>>, %arg8: memref<1x1x256xf32, #tpu.memory_space<vmem>>) attributes {dimension_semantics = [#tpu.dimension_semantics<parallel>], iteration_bounds = array<i64: 1>, scalar_prefetch = 0 : i64, scratch_operands = 0 : i64, tpu.core_type = #tpu.core_type<tc>, window_params = [{transform_indices = @transform_0, window_bounds = array<i64: 256, 32>}, {pipeline_mode = #tpu.pipeline_mode<synchronous>, transform_indices = @transform_1, window_bounds = array<i64: 32, 512>}, {pipeline_mode = #tpu.pipeline_mode<synchronous>, transform_indices = @transform_2, window_bounds = array<i64: 1, 512>}, {pipeline_mode = #tpu.pipeline_mode<synchronous>, transform_indices = @transform_3, window_bounds = array<i64: 512, 256>}, {pipeline_mode = #tpu.pipeline_mode<synchronous>, transform_indices = @transform_4, window_bounds = array<i64: 1, 256>}, {pipeline_mode = #tpu.pipeline_mode<synchronous>, transform_indices = @transform_5, window_bounds = array<i64: 1, 256>}, {transform_indices = @transform_6, window_bounds = array<i64: 1, 1>}, {transform_indices = @transform_7, window_bounds = array<i64: 1, 1, 256>}]} {
    %c0 = arith.constant 0 : index
    %c0_0 = arith.constant 0 : index
    %0 = vector.load %arg1[%c0, %c0_0] : memref<256x32xf32, #tpu.memory_space<vmem>>, vector<256x32xf32>
    %c0_1 = arith.constant 0 : index
    %c0_2 = arith.constant 0 : index
    %1 = vector.load %arg2[%c0_1, %c0_2] : memref<32x512xf32, #tpu.memory_space<vmem>>, vector<32x512xf32>
    %cst = arith.constant dense<0.000000e+00> : vector<256x512xf32>
    %2 = tpu.matmul %0, %1, %cst {dimension_numbers = #tpu.dot_dimension_numbers<[1], [0], [0], [1], [0, 0, 1, 1], [], []>} : vector<256x32xf32>, vector<32x512xf32>, vector<256x512xf32> -> vector<256x512xf32>
    %c0_3 = arith.constant 0 : index
    %c0_4 = arith.constant 0 : index
    %3 = vector.load %arg3[%c0_3, %c0_4] : memref<1x512xf32, #tpu.memory_space<vmem>>, vector<1x512xf32>
    %4 = vector.broadcast %3 : vector<1x512xf32> to vector<256x512xf32>
    %5 = arith.addf %2, %4 : vector<256x512xf32>
    %cst_5 = arith.constant 0.000000e+00 : f32
    %6 = vector.broadcast %cst_5 : f32 to vector<256x512xf32>
    %7 = arith.maximumf %5, %6 : vector<256x512xf32>
    %c0_6 = arith.constant 0 : index
    %c0_7 = arith.constant 0 : index
    %8 = vector.load %arg4[%c0_6, %c0_7] : memref<512x256xf32, #tpu.memory_space<vmem>>, vector<512x256xf32>
    %cst_8 = arith.constant dense<0.000000e+00> : vector<256x256xf32>
    %9 = tpu.matmul %7, %8, %cst_8 {dimension_numbers = #tpu.dot_dimension_numbers<[1], [0], [0], [1], [0, 0, 1, 1], [], []>} : vector<256x512xf32>, vector<512x256xf32>, vector<256x256xf32> -> vector<256x256xf32>
    %c0_9 = arith.constant 0 : index
    %c0_10 = arith.constant 0 : index
    %10 = vector.load %arg5[%c0_9, %c0_10] : memref<1x256xf32, #tpu.memory_space<vmem>>, vector<1x256xf32>
    %11 = vector.broadcast %10 : vector<1x256xf32> to vector<256x256xf32>
    %12 = arith.addf %9, %11 : vector<256x256xf32>
    %cst_11 = arith.constant 0.000000e+00 : f32
    %13 = vector.broadcast %cst_11 : f32 to vector<256x256xf32>
    %14 = arith.maximumf %12, %13 : vector<256x256xf32>
    %c0_12 = arith.constant 0 : index
    %c0_13 = arith.constant 0 : index
    %15 = vector.load %arg6[%c0_12, %c0_13] : memref<1x256xf32, #tpu.memory_space<vmem>>, vector<1x256xf32>
    %cst_14 = arith.constant dense<0.000000e+00> : vector<1x256xf32>
    %16 = tpu.matmul %15, %14, %cst_14 {dimension_numbers = #tpu.dot_dimension_numbers<[1], [1], [0], [0], [0, 0, 1, 0], [], []>} : vector<1x256xf32>, vector<256x256xf32>, vector<1x256xf32> -> vector<1x256xf32>
    %c0_15 = arith.constant 0 : index
    %c0_16 = arith.constant 0 : index
    %17 = memref.load %arg7[%c0_15, %c0_16] : memref<1x1xf32, #tpu.memory_space<smem>>
    %18 = vector.broadcast %17 : f32 to vector<1x256xf32>
    %19 = arith.addf %16, %18 : vector<1x256xf32>
    %20 = vector.shape_cast %19 : vector<1x256xf32> to vector<1x1x256xf32>
    %c0_17 = arith.constant 0 : index
    %c0_18 = arith.constant 0 : index
    %c0_19 = arith.constant 0 : index
    %21 = vector.load %arg8[%c0_17, %c0_18, %c0_19] : memref<1x1x256xf32, #tpu.memory_space<vmem>>, vector<1x1x256xf32>
    tpu.vector_store %arg8[%c0_17, %c0_18, %c0_19], %20 {strides = array<i32>} : memref<1x1x256xf32, #tpu.memory_space<vmem>>, vector<1x1x256xf32>,
    return
  }
  func.func @transform_0(%arg0: i32) -> (i32, i32) {
    %c0_i32 = arith.constant 0 : i32
    %c0_i32_0 = arith.constant 0 : i32
    return %arg0, %c0_i32 : i32, i32
  }
  func.func @transform_1(%arg0: i32) -> (i32, i32) {
    %c0_i32 = arith.constant 0 : i32
    %c0_i32_0 = arith.constant 0 : i32
    %c0_i32_1 = arith.constant 0 : i32
    return %c0_i32, %c0_i32_0 : i32, i32
  }
  func.func @transform_2(%arg0: i32) -> (i32, i32) {
    %c0_i32 = arith.constant 0 : i32
    %c0_i32_0 = arith.constant 0 : i32
    %c0_i32_1 = arith.constant 0 : i32
    return %c0_i32, %c0_i32_0 : i32, i32
  }
  func.func @transform_3(%arg0: i32) -> (i32, i32) {
    %c0_i32 = arith.constant 0 : i32
    %c0_i32_0 = arith.constant 0 : i32
    %c0_i32_1 = arith.constant 0 : i32
    return %c0_i32, %c0_i32_0 : i32, i32
  }
  func.func @transform_4(%arg0: i32) -> (i32, i32) {
    %c0_i32 = arith.constant 0 : i32
    %c0_i32_0 = arith.constant 0 : i32
    %c0_i32_1 = arith.constant 0 : i32
    return %c0_i32, %c0_i32_0 : i32, i32
  }
  func.func @transform_5(%arg0: i32) -> (i32, i32) {
    %c0_i32 = arith.constant 0 : i32
    %c0_i32_0 = arith.constant 0 : i32
    %c0_i32_1 = arith.constant 0 : i32
    return %c0_i32, %c0_i32_0 : i32, i32
  }
  func.func @transform_6(%arg0: i32) -> (i32, i32) {
    %c0_i32 = arith.constant 0 : i32
    %c0_i32_0 = arith.constant 0 : i32
    %c0_i32_1 = arith.constant 0 : i32
    return %c0_i32, %c0_i32_0 : i32, i32
  }
  func.func @transform_7(%arg0: i32) -> (i32, i32, i32) {
    %c0_i32 = arith.constant 0 : i32
    %c0_i32_0 = arith.constant 0 : i32
    %c0_i32_1 = arith.constant 0 : i32
    return %arg0, %c0_i32, %c0_i32_0 : i32, i32, i32
  }
}

</mosaic_0001>

<llo_original>
// kernel: tpu_custom_call.1
$region0: #{tpu_custom_call.1}
  #allocation0 [shape = 'u32[]', space=smem, size = 0x4, offset = 0x4, fixed_abs, tag = 'smem constant byte address 0x4 - core index']
  #allocation1 [shape = 'u32[144,128]{1,0:T(1,128)}', space=vmem, size = 0x12000, scoped, tag = 'internal scratch']
  #allocation2 [shape = 'f32[1,1]{1,0:T(1,128)S(6)}', space=smem, size = 0x200, scoped, tag = 'scoped memory for tpu_custom_call.1']
  %s0 = inlined_call_operand.vmem [shape: f32[256,32], index: 0, kind: input, shape index: {}]
  %s1 = inlined_call_operand.vmem [shape: f32[32,512], index: 1, kind: input, shape index: {}]
  %s2 = inlined_call_operand.vmem [shape: f32[1,512], index: 2, kind: input, shape index: {}]
  %s3 = inlined_call_operand.hbm [shape: f32[512,256], index: 3, kind: input, shape index: {}]
  %s4 = inlined_call_operand.vmem [shape: f32[1,256], index: 4, kind: input, shape index: {}]
  %s5 = inlined_call_operand.vmem [shape: f32[1,256], index: 5, kind: input, shape index: {}]
  %s6 = inlined_call_operand.<no memory space> [shape: f32[1,1], index: 6, kind: input, shape index: {}]
  %s7 = inlined_call_operand.hbm [shape: f32[1,1,256], index: 7, kind: output, shape index: {}]
  %s8 = sld [smem:[#allocation0]]
  $region42: #{tpu_custom_call.1} parent=0
    _
  %s10 = ssub.s32 1, %s8
  %s11 = scalar_select 0, %s10, %s8
  %12 = sst [smem:[#allocation2]] %s6
  $region1: #{tpu_custom_call.1} parent=0
    #allocation3 [shape = 'u8[524288]{0}', space=vmem, size = 0x80000, scoped, tag = 'input window, operand 3, single buffered']
    #allocation4 [shape = 's32[1]{0}', space=sflag, size = 0x4, scoped, tag = 'scoped memory for tpu_custom_call.1']
    #allocation5 [shape = 's32[1]{0}', space=sflag, size = 0x4, scoped, tag = 'scoped memory for tpu_custom_call.1']
    #allocation6 [shape = 'u8[1024]{0}', space=vmem, size = 0x400, scoped, tag = 'output window, operand 0, single buffered']
    %13 = vsyncpa [#allocation4], 0
    %14 = vsyncpa [#allocation5], 0
    // Predicated region
    $region2: #{tpu_custom_call.1} parent=1 // pred_check
      _
    $region3: #{tpu_custom_call.1} parent=1 // pred_check_branch
      %16 = sbr.rel (0) target = $region5
    $region4: #{tpu_custom_call.1} parent=1 // pred_region
      _
    $region5: #{tpu_custom_call.1} parent=1 // pred_fallthru
      _
    // Predicated region
    $region6: #{tpu_custom_call.1} parent=1 // pred_check
      _
    $region7: #{tpu_custom_call.1} parent=1 // pred_check_branch
      %18 = sbr.rel (0) target = $region9
    $region8: #{tpu_custom_call.1} parent=1 // pred_region
      _
    $region9: #{tpu_custom_call.1} parent=1 // pred_fallthru
      _
    // Predicated region
    $region10: #{tpu_custom_call.1} parent=1 // pred_check
      _
    $region11: #{tpu_custom_call.1} parent=1 // pred_check_branch
      %20 = sbr.rel (0) target = $region13
    $region12: #{tpu_custom_call.1} parent=1 // pred_region
      _
    $region13: #{tpu_custom_call.1} parent=1 // pred_fallthru
      _
    // Predicated region
    $region14: #{tpu_custom_call.1} parent=1 // pred_check
      _
    $region15: #{tpu_custom_call.1} parent=1 // pred_check_branch
      %22 = sbr.rel (0) target = $region17
    $region16: #{tpu_custom_call.1} parent=1 // pred_region
      %s24 = ssub.s32 16384, 16384
      %25 = vsyncadd [#allocation4], %s24
      %s26 = sshll.u32 [#allocation3], 4
      %s27 = int_to_ptr.vmem [resolvable:$true] %s26
      %32 = dma.hbm_to_vmem [thread:$0]  %s3, 16384, %s27, [#allocation4], 256, 256, 16
    $region17: #{tpu_custom_call.1} parent=1 // pred_fallthru
      _
    // Predicated region
    $region18: #{tpu_custom_call.1} parent=1 // pred_check
      _
    $region19: #{tpu_custom_call.1} parent=1 // pred_check_branch
      %34 = sbr.rel (0) target = $region21
    $region20: #{tpu_custom_call.1} parent=1 // pred_region
      _
    $region21: #{tpu_custom_call.1} parent=1 // pred_fallthru
      _
    // Predicated region
    $region22: #{tpu_custom_call.1} parent=1 // pred_check
      _
    $region23: #{tpu_custom_call.1} parent=1 // pred_check_branch
      %36 = sbr.rel (0) target = $region25
    $region24: #{tpu_custom_call.1} parent=1 // pred_region
      _
    $region25: #{tpu_custom_call.1} parent=1 // pred_fallthru
      _
    // Predicated region
    $region26: #{tpu_custom_call.1} parent=1 // pred_check
      _
    $region27: #{tpu_custom_call.1} parent=1 // pred_check_branch
      %38 = sbr.rel (0) target = $region29
    $region28: #{tpu_custom_call.1} parent=1 // pred_region
      _
    $region29: #{tpu_custom_call.1} parent=1 // pred_fallthru
      _
    // Predicated region
    $region30: #{tpu_custom_call.1} parent=1 // pred_check
      _
    $region31: #{tpu_custom_call.1} parent=1 // pred_check_branch
      %40 = sbr.rel (0) target = $region33
    $region32: #{tpu_custom_call.1} parent=1 // pred_region
      %41 = dma.done [#allocation4], 16384
    $region33: #{tpu_custom_call.1} parent=1 // pred_fallthru
      _
    %v42 = vld [vmem:[%s0] sm:$0xff]
    %v43 = vld [vmem:[%s0 + $0x8] sm:$0xff]
    %v44 = vld [vmem:[%s0 + $0x10] sm:$0xff]
    %v45 = vld [vmem:[%s0 + $0x18] sm:$0xff]
    %v46 = vld [vmem:[%s0 + $0x20] sm:$0xff]
    %v47 = vld [vmem:[%s0 + $0x28] sm:$0xff]
    %v48 = vld [vmem:[%s0 + $0x30] sm:$0xff]
    %v49 = vld [vmem:[%s0 + $0x38] sm:$0xff]
    %v50 = vld [vmem:[%s0 + $0x40] sm:$0xff]
    %v51 = vld [vmem:[%s0 + $0x48] sm:$0xff]
    %v52 = vld [vmem:[%s0 + $0x50] sm:$0xff]
    %v53 = vld [vmem:[%s0 + $0x58] sm:$0xff]
    %v54 = vld [vmem:[%s0 + $0x60] sm:$0xff]
    %v55 = vld [vmem:[%s0 + $0x68] sm:$0xff]
    %v56 = vld [vmem:[%s0 + $0x70] sm:$0xff]
    %v57 = vld [vmem:[%s0 + $0x78] sm:$0xff]
    %v58 = vld [vmem:[%s0 + $0x80] sm:$0xff]
    %v59 = vld [vmem:[%s0 + $0x88] sm:$0xff]
    %v60 = vld [vmem:[%s0 + $0x90] sm:$0xff]
    %v61 = vld [vmem:[%s0 + $0x98] sm:$0xff]
    %v62 = vld [vmem:[%s0 + $0xa0] sm:$0xff]
    %v63 = vld [vmem:[%s0 + $0xa8] sm:$0xff]
    %v64 = vld [vmem:[%s0 + $0xb0] sm:$0xff]
    %v65 = vld [vmem:[%s0 + $0xb8] sm:$0xff]
    %v66 = vld [vmem:[%s0 + $0xc0] sm:$0xff]
    %v67 = vld [vmem:[%s0 + $0xc8] sm:$0xff]
    %v68 = vld [vmem:[%s0 + $0xd0] sm:$0xff]
    %v69 = vld [vmem:[%s0 + $0xd8] sm:$0xff]
    %v70 = vld [vmem:[%s0 + $0xe0] sm:$0xff]
    %v71 = vld [vmem:[%s0 + $0xe8] sm:$0xff]
    %v72 = vld [vmem:[%s0 + $0xf0] sm:$0xff]
    %v73 = vld [vmem:[%s0 + $0xf8] sm:$0xff]
    %v74 = vld [vmem:[%s1] sm:$0xff]
    %v75 = vld [vmem:[%s1 + $0x8] sm:$0xff]
    %v76 = vld [vmem:[%s1 + $0x10] sm:$0xff]
    %v77 = vld [vmem:[%s1 + $0x18] sm:$0xff]
    %v78 = vld [vmem:[%s1 + $0x20] sm:$0xff]
    %v79 = vld [vmem:[%s1 + $0x28] sm:$0xff]
    %v80 = vld [vmem:[%s1 + $0x30] sm:$0xff]
    %v81 = vld [vmem:[%s1 + $0x38] sm:$0xff]
    %v82 = vld [vmem:[%s1 + $0x40] sm:$0xff]
    %v83 = vld [vmem:[%s1 + $0x48] sm:$0xff]
    %v84 = vld [vmem:[%s1 + $0x50] sm:$0xff]
    %v85 = vld [vmem:[%s1 + $0x58] sm:$0xff]
    %v86 = vld [vmem:[%s1 + $0x60] sm:$0xff]
    %v87 = vld [vmem:[%s1 + $0x68] sm:$0xff]
    %v88 = vld [vmem:[%s1 + $0x70] sm:$0xff]
    %v89 = vld [vmem:[%s1 + $0x78] sm:$0xff]
    %v90 = vld [vmem:[%s2] sm:$0xf]
    %v92 = vlaneseq
    %v93 = vshrl.u32 %v92, 7
    %v94 = vsub.s32 0, %v93
    %v95 = vrot.slane %v90, %v94
    %v96 = vlaneseq
    %v97 = vshrl.u32 %v96, 7
    %v98 = vsub.s32 1, %v97
    %v99 = vrot.slane %v90, %v98
    %v100 = vlaneseq
    %v101 = vshrl.u32 %v100, 7
    %v102 = vsub.s32 2, %v101
    %v103 = vrot.slane %v90, %v102
    %v104 = vlaneseq
    %v105 = vshrl.u32 %v104, 7
    %v106 = vsub.s32 3, %v105
    %v107 = vrot.slane %v90, %v106
    %vm112 = vcmask 261120
    %v114 = vsel %vm112, %v42, 0
    %v117 = vsel %vm112, %v43, 0
    %v120 = vsel %vm112, %v44, 0
    %v123 = vsel %vm112, %v45, 0
    %v126 = vsel %vm112, %v46, 0
    %v129 = vsel %vm112, %v47, 0
    %v132 = vsel %vm112, %v48, 0
    %v135 = vsel %vm112, %v49, 0
    %v138 = vsel %vm112, %v50, 0
    %v141 = vsel %vm112, %v51, 0
    %v144 = vsel %vm112, %v52, 0
    %v147 = vsel %vm112, %v53, 0
    %v150 = vsel %vm112, %v54, 0
    %v153 = vsel %vm112, %v55, 0
    %v156 = vsel %vm112, %v56, 0
    %v159 = vsel %vm112, %v57, 0
    %v162 = vsel %vm112, %v58, 0
    %v165 = vsel %vm112, %v59, 0
    %v168 = vsel %vm112, %v60, 0
    %v171 = vsel %vm112, %v61, 0
    %v174 = vsel %vm112, %v62, 0
    %v177 = vsel %vm112, %v63, 0
    %v180 = vsel %vm112, %v64, 0
    %v183 = vsel %vm112, %v65, 0
    %v186 = vsel %vm112, %v66, 0
    %v189 = vsel %vm112, %v67, 0
    %v192 = vsel %vm112, %v68, 0
    %v195 = vsel %vm112, %v69, 0
    %v198 = vsel %vm112, %v70, 0
    %v201 = vsel %vm112, %v71, 0
    %v204 = vsel %vm112, %v72, 0
    %v207 = vsel %vm112, %v73, 0
    %209 = vmatprep.subr.mxu0 %v75
    %210 = vmatpush1.msra.mxu0 %v74
    %211 = vmatprep.subr.mxu0 %v79
    %212 = vmatpush1.msra.mxu0 %v78
    %213 = vmatprep.subr.mxu0 %v83
    %214 = vmatpush1.msra.mxu0 %v82
    %215 = vmatprep.subr.mxu0 %v87
    %216 = vmatpush1.msra.mxu0 %v86
    %217 = vmatprep.subr.mxu0 0.0
    %218 = vmatpush1.msra.mxu0 0.0
    %219 = vmatprep.subr.mxu0 0.0
    %220 = vmatpush1.msra.mxu0 0.0
    %221 = vmatprep.subr.mxu0 0.0
    %222 = vmatpush1.msra.mxu0 0.0
    %223 = vmatprep.subr.mxu0 0.0
    %224 = vmatpush1.msra.mxu0 0.0
    %225 = vmatprep.subr.mxu0 0.0
    %226 = vmatpush1.msra.mxu0 0.0
    %227 = vmatprep.subr.mxu0 0.0
    %228 = vmatpush1.msra.mxu0 0.0
    %229 = vmatprep.subr.mxu0 0.0
    %230 = vmatpush1.msra.mxu0 0.0
    %231 = vmatprep.subr.mxu0 0.0
    %232 = vmatpush1.msra.mxu0 0.0
    %233 = vmatprep.subr.mxu0 0.0
    %234 = vmatpush1.msra.mxu0 0.0
    %235 = vmatprep.subr.mxu0 0.0
    %236 = vmatpush1.msra.mxu0 0.0
    %237 = vmatprep.subr.mxu0 0.0
    %238 = vmatpush1.msra.mxu0 0.0
    %239 = vmatprep.subr.mxu0 0.0
    %240 = vmatpush1.msra.mxu0 0.0
    %241 = vmatprep.subr.mxu0 0.0
    %242 = vmatpush1.msra.mxu0 0.0
    %243 = vmatprep.subr.mxu0 0.0
    %244 = vmatpush1.msra.mxu0 0.0
    %245 = vmatprep.subr.mxu0 0.0
    %246 = vmatpush1.msra.mxu0 0.0
    %247 = vmatprep.subr.mxu0 0.0
    %248 = vmatpush1.msra.mxu0 0.0
    %249 = vmatprep.subr.mxu0 0.0
    %250 = vmatpush1.msra.mxu0 0.0
    %251 = vmatprep.subr.mxu0 0.0
    %252 = vmatpush1.msra.mxu0 0.0
    %253 = vmatprep.subr.mxu0 0.0
    %254 = vmatpush1.msra.mxu0 0.0
    %255 = vmatprep.subr.mxu0 0.0
    %256 = vmatpush1.msra.mxu0 0.0
    %257 = vmatprep.subr.mxu0 0.0
    %258 = vmatpush1.msra.mxu0 0.0
    %259 = vmatprep.subr.mxu0 0.0
    %260 = vmatpush1.msra.mxu0 0.0
    %261 = vmatprep.subr.mxu0 0.0
    %262 = vmatpush1.msra.mxu0 0.0
    %263 = vmatprep.subr.mxu0 0.0
    %264 = vmatpush1.msra.mxu0 0.0
    %265 = vmatprep.subr.mxu0 0.0
    %266 = vmatpush1.msra.mxu0 0.0
    %267 = vmatprep.subr.mxu0 0.0
    %268 = vmatpush1.msra.mxu0 0.0
    %269 = vmatprep.subr.mxu0 0.0
    %270 = vmatpush1.msra.mxu0 0.0
    %271 = vmatprep.subr.mxu0 0.0
    %272 = vmatpush1.msra.mxu0 0.0
    %273 = vmatprep.mubr.f32.mxu0 0.0
    %274 = vmatmul.mubr.f32.gmra.mrb[0].mxu0 %v114
    %v275 = vpop.f32.mrb[0].mxu0
    %v276 = vadd.f32 %v95, %v275
    %v277 = vpop.f32.mrb[0].mxu0
    %v278 = vadd.f32 %v99, %v277
    %279 = vmatprep.mubr.f32.mxu0 0.0
    %280 = vmatmul.mubr.f32.gmra.mrb[0].mxu0 %v117
    %v281 = vpop.f32.mrb[0].mxu0
    %v282 = vadd.f32 %v95, %v281
    %v283 = vpop.f32.mrb[0].mxu0
    %v284 = vadd.f32 %v99, %v283
    %285 = vmatprep.mubr.f32.mxu0 0.0
    %286 = vmatmul.mubr.f32.gmra.mrb[0].mxu0 %v120
    %v287 = vpop.f32.mrb[0].mxu0
    %v288 = vadd.f32 %v95, %v287
    %v289 = vpop.f32.mrb[0].mxu0
    %v290 = vadd.f32 %v99, %v289
    %291 = vmatprep.mubr.f32.mxu0 0.0
    %292 = vmatmul.mubr.f32.gmra.mrb[0].mxu0 %v123
    %v293 = vpop.f32.mrb[0].mxu0
    %v294 = vadd.f32 %v95, %v293
    %v295 = vpop.f32.mrb[0].mxu0
    %v296 = vadd.f32 %v99, %v295
    %297 = vmatprep.mubr.f32.mxu0 0.0
    %298 = vmatmul.mubr.f32.gmra.mrb[0].mxu0 %v126
    %v299 = vpop.f32.mrb[0].mxu0
    %v300 = vadd.f32 %v95, %v299
    %v301 = vpop.f32.mrb[0].mxu0
    %v302 = vadd.f32 %v99, %v301
    %303 = vmatprep.mubr.f32.mxu0 0.0
    %304 = vmatmul.mubr.f32.gmra.mrb[0].mxu0 %v129
    %v305 = vpop.f32.mrb[0].mxu0
    %v306 = vadd.f32 %v95, %v305
    %v307 = vpop.f32.mrb[0].mxu0
    %v308 = vadd.f32 %v99, %v307
    %309 = vmatprep.mubr.f32.mxu0 0.0
    %310 = vmatmul.mubr.f32.gmra.mrb[0].mxu0 %v132
    %v311 = vpop.f32.mrb[0].mxu0
    %v312 = vadd.f32 %v95, %v311
    %v313 = vpop.f32.mrb[0].mxu0
    %v314 = vadd.f32 %v99, %v313
    %315 = vmatprep.mubr.f32.mxu0 0.0
    %316 = vmatmul.mubr.f32.gmra.mrb[0].mxu0 %v135
    %v317 = vpop.f32.mrb[0].mxu0
    %v318 = vadd.f32 %v95, %v317
    %v319 = vpop.f32.mrb[0].mxu0
    %v320 = vadd.f32 %v99, %v319
    %321 = vmatprep.mubr.f32.mxu0 0.0
    %322 = vmatmul.mubr.f32.gmra.mrb[0].mxu0 %v138
    %v323 = vpop.f32.mrb[0].mxu0
    %v324 = vadd.f32 %v95, %v323
    %v325 = vpop.f32.mrb[0].mxu0
    %v326 = vadd.f32 %v99, %v325
    %327 = vmatprep.mubr.f32.mxu0 0.0
    %328 = vmatmul.mubr.f32.gmra.mrb[0].mxu0 %v141
    %v329 = vpop.f32.mrb[0].mxu0
    %v330 = vadd.f32 %v95, %v329
    %v331 = vpop.f32.mrb[0].mxu0
    %v332 = vadd.f32 %v99, %v331
    %333 = vmatprep.mubr.f32.mxu0 0.0
    %334 = vmatmul.mubr.f32.gmra.mrb[0].mxu0 %v144
    %v335 = vpop.f32.mrb[0].mxu0
    %v336 = vadd.f32 %v95, %v335
    %v337 = vpop.f32.mrb[0].mxu0
    %v338 = vadd.f32 %v99, %v337
    %339 = vmatprep.mubr.f32.mxu0 0.0
    %340 = vmatmul.mubr.f32.gmra.mrb[0].mxu0 %v147
    %v341 = vpop.f32.mrb[0].mxu0
    %v342 = vadd.f32 %v95, %v341
    %v343 = vpop.f32.mrb[0].mxu0
    %v344 = vadd.f32 %v99, %v343
    %345 = vmatprep.mubr.f32.mxu0 0.0
    %346 = vmatmul.mubr.f32.gmra.mrb[0].mxu0 %v150
    %v347 = vpop.f32.mrb[0].mxu0
    %v348 = vadd.f32 %v95, %v347
    %v349 = vpop.f32.mrb[0].mxu0
    %v350 = vadd.f32 %v99, %v349
    %351 = vmatprep.mubr.f32.mxu0 0.0
    %352 = vmatmul.mubr.f32.gmra.mrb[0].mxu0 %v153
    %v353 = vpop.f32.mrb[0].mxu0
    %v354 = vadd.f32 %v95, %v353
    %v355 = vpop.f32.mrb[0].mxu0
    %v356 = vadd.f32 %v99, %v355
    %357 = vmatprep.mubr.f32.mxu0 0.0
    %358 = vmatmul.mubr.f32.gmra.mrb[0].mxu0 %v156
    %v359 = vpop.f32.mrb[0].mxu0
    %v360 = vadd.f32 %v95, %v359
    %v361 = vpop.f32.mrb[0].mxu0
    %v362 = vadd.f32 %v99, %v361
    %363 = vmatprep.mubr.f32.mxu0 0.0
    %364 = vmatmul.mubr.f32.gmra.mrb[0].mxu0 %v159
    %v365 = vpop.f32.mrb[0].mxu0
    %v366 = vadd.f32 %v95, %v365
    %v367 = vpop.f32.mrb[0].mxu0
    %v368 = vadd.f32 %v99, %v367
    %369 = vmatprep.mubr.f32.mxu0 0.0
    %370 = vmatmul.mubr.f32.gmra.mrb[0].mxu0 %v162
    %v371 = vpop.f32.mrb[0].mxu0
    %v372 = vadd.f32 %v95, %v371
    %v373 = vpop.f32.mrb[0].mxu0
    %v374 = vadd.f32 %v99, %v373
    %375 = vmatprep.mubr.f32.mxu0 0.0
    %376 = vmatmul.mubr.f32.gmra.mrb[0].mxu0 %v165
    %v377 = vpop.f32.mrb[0].mxu0
    %v378 = vadd.f32 %v95, %v377
    %v379 = vpop.f32.mrb[0].mxu0
    %v380 = vadd.f32 %v99, %v379
    %381 = vmatprep.mubr.f32.mxu0 0.0
    %382 = vmatmul.mubr.f32.gmra.mrb[0].mxu0 %v168
    %v383 = vpop.f32.mrb[0].mxu0
    %v384 = vadd.f32 %v95, %v383
    %v385 = vpop.f32.mrb[0].mxu0
    %v386 = vadd.f32 %v99, %v385
    %387 = vmatprep.mubr.f32.mxu0 0.0
    %388 = vmatmul.mubr.f32.gmra.mrb[0].mxu0 %v171
    %v389 = vpop.f32.mrb[0].mxu0
    %v390 = vadd.f32 %v95, %v389
    %v391 = vpop.f32.mrb[0].mxu0
    %v392 = vadd.f32 %v99, %v391
    %393 = vmatprep.mubr.f32.mxu0 0.0
    %394 = vmatmul.mubr.f32.gmra.mrb[0].mxu0 %v174
    %v395 = vpop.f32.mrb[0].mxu0
    %v396 = vadd.f32 %v95, %v395
    %v397 = vpop.f32.mrb[0].mxu0
    %v398 = vadd.f32 %v99, %v397
    %399 = vmatprep.mubr.f32.mxu0 0.0
    %400 = vmatmul.mubr.f32.gmra.mrb[0].mxu0 %v177
    %v401 = vpop.f32.mrb[0].mxu0
    %v402 = vadd.f32 %v95, %v401
    %v403 = vpop.f32.mrb[0].mxu0
    %v404 = vadd.f32 %v99, %v403
    %405 = vmatprep.mubr.f32.mxu0 0.0
    %406 = vmatmul.mubr.f32.gmra.mrb[0].mxu0 %v180
    %v407 = vpop.f32.mrb[0].mxu0
    %v408 = vadd.f32 %v95, %v407
    %v409 = vpop.f32.mrb[0].mxu0
    %v410 = vadd.f32 %v99, %v409
    %411 = vmatprep.mubr.f32.mxu0 0.0
    %412 = vmatmul.mubr.f32.gmra.mrb[0].mxu0 %v183
    %v413 = vpop.f32.mrb[0].mxu0
    %v414 = vadd.f32 %v95, %v413
    %v415 = vpop.f32.mrb[0].mxu0
    %v416 = vadd.f32 %v99, %v415
    %417 = vmatprep.mubr.f32.mxu0 0.0
    %418 = vmatmul.mubr.f32.gmra.mrb[0].mxu0 %v186
    %v419 = vpop.f32.mrb[0].mxu0
    %v420 = vadd.f32 %v95, %v419
    %v421 = vpop.f32.mrb[0].mxu0
    %v422 = vadd.f32 %v99, %v421
    %423 = vmatprep.mubr.f32.mxu0 0.0
    %424 = vmatmul.mubr.f32.gmra.mrb[0].mxu0 %v189
    %v425 = vpop.f32.mrb[0].mxu0
    %v426 = vadd.f32 %v95, %v425
    %v427 = vpop.f32.mrb[0].mxu0
    %v428 = vadd.f32 %v99, %v427
    %429 = vmatprep.mubr.f32.mxu0 0.0
    %430 = vmatmul.mubr.f32.gmra.mrb[0].mxu0 %v192
    %v431 = vpop.f32.mrb[0].mxu0
    %v432 = vadd.f32 %v95, %v431
    %v433 = vpop.f32.mrb[0].mxu0
    %v434 = vadd.f32 %v99, %v433
    %435 = vmatprep.mubr.f32.mxu0 0.0
    %436 = vmatmul.mubr.f32.gmra.mrb[0].mxu0 %v195
    %v437 = vpop.f32.mrb[0].mxu0
    %v438 = vadd.f32 %v95, %v437
    %v439 = vpop.f32.mrb[0].mxu0
    %v440 = vadd.f32 %v99, %v439
    %441 = vmatprep.mubr.f32.mxu0 0.0
    %442 = vmatmul.mubr.f32.gmra.mrb[0].mxu0 %v198
    %v443 = vpop.f32.mrb[0].mxu0
    %v444 = vadd.f32 %v95, %v443
    %v445 = vpop.f32.mrb[0].mxu0
    %v446 = vadd.f32 %v99, %v445
    %447 = vmatprep.mubr.f32.mxu0 0.0
    %448 = vmatmul.mubr.f32.gmra.mrb[0].mxu0 %v201
    %v449 = vpop.f32.mrb[0].mxu0
    %v450 = vadd.f32 %v95, %v449
    %v451 = vpop.f32.mrb[0].mxu0
    %v452 = vadd.f32 %v99, %v451
    %453 = vmatprep.mubr.f32.mxu0 0.0
    %454 = vmatmul.mubr.f32.gmra.mrb[0].mxu0 %v204
    %v455 = vpop.f32.mrb[0].mxu0
    %v456 = vadd.f32 %v95, %v455
    %v457 = vpop.f32.mrb[0].mxu0
    %v458 = vadd.f32 %v99, %v457
    %459 = vmatprep.mubr.f32.mxu0 0.0
    %460 = vmatmul.mubr.f32.gmra.mrb[0].mxu0 %v207
    %v461 = vpop.f32.mrb[0].mxu0
    %v462 = vadd.f32 %v95, %v461
    %v463 = vpop.f32.mrb[0].mxu0
    %v464 = vadd.f32 %v99, %v463
    %465 = vdwg.mxu0
    %466 = vmatprep.subr.mxu0 %v77
    %467 = vmatpush1.msra.mxu0 %v76
    %468 = vmatprep.subr.mxu0 %v81
    %469 = vmatpush1.msra.mxu0 %v80
    %470 = vmatprep.subr.mxu0 %v85
    %471 = vmatpush1.msra.mxu0 %v84
    %472 = vmatprep.subr.mxu0 %v89
    %473 = vmatpush1.msra.mxu0 %v88
    %474 = vmatprep.subr.mxu0 0.0
    %475 = vmatpush1.msra.mxu0 0.0
    %476 = vmatprep.subr.mxu0 0.0
    %477 = vmatpush1.msra.mxu0 0.0
    %478 = vmatprep.subr.mxu0 0.0
    %479 = vmatpush1.msra.mxu0 0.0
    %480 = vmatprep.subr.mxu0 0.0
    %481 = vmatpush1.msra.mxu0 0.0
    %482 = vmatprep.subr.mxu0 0.0
    %483 = vmatpush1.msra.mxu0 0.0
    %484 = vmatprep.subr.mxu0 0.0
    %485 = vmatpush1.msra.mxu0 0.0
    %486 = vmatprep.subr.mxu0 0.0
    %487 = vmatpush1.msra.mxu0 0.0
    %488 = vmatprep.subr.mxu0 0.0
    %489 = vmatpush1.msra.mxu0 0.0
    %490 = vmatprep.subr.mxu0 0.0
    %491 = vmatpush1.msra.mxu0 0.0
    %492 = vmatprep.subr.mxu0 0.0
    %493 = vmatpush1.msra.mxu0 0.0
    %494 = vmatprep.subr.mxu0 0.0
    %495 = vmatpush1.msra.mxu0 0.0
    %496 = vmatprep.subr.mxu0 0.0
    %497 = vmatpush1.msra.mxu0 0.0
    %498 = vmatprep.subr.mxu0 0.0
    %499 = vmatpush1.msra.mxu0 0.0
    %500 = vmatprep.subr.mxu0 0.0
    %501 = vmatpush1.msra.mxu0 0.0
    %502 = vmatprep.subr.mxu0 0.0
    %503 = vmatpush1.msra.mxu0 0.0
    %504 = vmatprep.subr.mxu0 0.0
    %505 = vmatpush1.msra.mxu0 0.0
    %506 = vmatprep.subr.mxu0 0.0
    %507 = vmatpush1.msra.mxu0 0.0
    %508 = vmatprep.subr.mxu0 0.0
    %509 = vmatpush1.msra.mxu0 0.0
    %510 = vmatprep.subr.mxu0 0.0
    %511 = vmatpush1.msra.mxu0 0.0
    %512 = vmatprep.subr.mxu0 0.0
    %513 = vmatpush1.msra.mxu0 0.0
    %514 = vmatprep.subr.mxu0 0.0
    %515 = vmatpush1.msra.mxu0 0.0
    %516 = vmatprep.subr.mxu0 0.0
    %517 = vmatpush1.msra.mxu0 0.0
    %518 = vmatprep.subr.mxu0 0.0
    %519 = vmatpush1.msra.mxu0 0.0
    %520 = vmatprep.subr.mxu0 0.0
    %521 = vmatpush1.msra.mxu0 0.0
    %522 = vmatprep.subr.mxu0 0.0
    %523 = vmatpush1.msra.mxu0 0.0
    %524 = vmatprep.subr.mxu0 0.0
    %525 = vmatpush1.msra.mxu0 0.0
    %526 = vmatprep.subr.mxu0 0.0
    %527 = vmatpush1.msra.mxu0 0.0
    %528 = vmatprep.subr.mxu0 0.0
    %529 = vmatpush1.msra.mxu0 0.0
    %530 = vmatprep.mubr.f32.mxu0 0.0
    %531 = vmatmul.mubr.f32.gmra.mrb[0].mxu0 %v114
    %v532 = vpop.f32.mrb[0].mxu0
    %v533 = vadd.f32 %v103, %v532
    %v534 = vpop.f32.mrb[0].mxu0
    %v535 = vadd.f32 %v107, %v534
    %536 = vmatprep.mubr.f32.mxu0 0.0
    %537 = vmatmul.mubr.f32.gmra.mrb[0].mxu0 %v117
    %v538 = vpop.f32.mrb[0].mxu0
    %v539 = vadd.f32 %v103, %v538
    %v540 = vpop.f32.mrb[0].mxu0
    %v541 = vadd.f32 %v107, %v540
    %542 = vmatprep.mubr.f32.mxu0 0.0
    %543 = vmatmul.mubr.f32.gmra.mrb[0].mxu0 %v120
    %v544 = vpop.f32.mrb[0].mxu0
    %v545 = vadd.f32 %v103, %v544
    %v546 = vpop.f32.mrb[0].mxu0
    %v547 = vadd.f32 %v107, %v546
    %548 = vmatprep.mubr.f32.mxu0 0.0
    %549 = vmatmul.mubr.f32.gmra.mrb[0].mxu0 %v123
    %v550 = vpop.f32.mrb[0].mxu0
    %v551 = vadd.f32 %v103, %v550
    %v552 = vpop.f32.mrb[0].mxu0
    %v553 = vadd.f32 %v107, %v552
    %554 = vmatprep.mubr.f32.mxu0 0.0
    %555 = vmatmul.mubr.f32.gmra.mrb[0].mxu0 %v126
    %v556 = vpop.f32.mrb[0].mxu0
    %v557 = vadd.f32 %v103, %v556
    %v558 = vpop.f32.mrb[0].mxu0
    %v559 = vadd.f32 %v107, %v558
    %560 = vmatprep.mubr.f32.mxu0 0.0
    %561 = vmatmul.mubr.f32.gmra.mrb[0].mxu0 %v129
    %v562 = vpop.f32.mrb[0].mxu0
    %v563 = vadd.f32 %v103, %v562
    %v564 = vpop.f32.mrb[0].mxu0
    %v565 = vadd.f32 %v107, %v564
    %566 = vmatprep.mubr.f32.mxu0 0.0
    %567 = vmatmul.mubr.f32.gmra.mrb[0].mxu0 %v132
    %v568 = vpop.f32.mrb[0].mxu0
    %v569 = vadd.f32 %v103, %v568
    %v570 = vpop.f32.mrb[0].mxu0
    %v571 = vadd.f32 %v107, %v570
    %572 = vmatprep.mubr.f32.mxu0 0.0
    %573 = vmatmul.mubr.f32.gmra.mrb[0].mxu0 %v135
    %v574 = vpop.f32.mrb[0].mxu0
    %v575 = vadd.f32 %v103, %v574
    %v576 = vpop.f32.mrb[0].mxu0
    %v577 = vadd.f32 %v107, %v576
    %578 = vmatprep.mubr.f32.mxu0 0.0
    %579 = vmatmul.mubr.f32.gmra.mrb[0].mxu0 %v138
    %v580 = vpop.f32.mrb[0].mxu0
    %v581 = vadd.f32 %v103, %v580
    %v582 = vpop.f32.mrb[0].mxu0
    %v583 = vadd.f32 %v107, %v582
    %584 = vmatprep.mubr.f32.mxu0 0.0
    %585 = vmatmul.mubr.f32.gmra.mrb[0].mxu0 %v141
    %v586 = vpop.f32.mrb[0].mxu0
    %v587 = vadd.f32 %v103, %v586
    %v588 = vpop.f32.mrb[0].mxu0
    %v589 = vadd.f32 %v107, %v588
    %590 = vmatprep.mubr.f32.mxu0 0.0
    %591 = vmatmul.mubr.f32.gmra.mrb[0].mxu0 %v144
    %v592 = vpop.f32.mrb[0].mxu0
    %v593 = vadd.f32 %v103, %v592
    %v594 = vpop.f32.mrb[0].mxu0
    %v595 = vadd.f32 %v107, %v594
    %596 = vmatprep.mubr.f32.mxu0 0.0
    %597 = vmatmul.mubr.f32.gmra.mrb[0].mxu0 %v147
    %v598 = vpop.f32.mrb[0].mxu0
    %v599 = vadd.f32 %v103, %v598
    %v600 = vpop.f32.mrb[0].mxu0
    %v601 = vadd.f32 %v107, %v600
    %602 = vmatprep.mubr.f32.mxu0 0.0
    %603 = vmatmul.mubr.f32.gmra.mrb[0].mxu0 %v150
    %v604 = vpop.f32.mrb[0].mxu0
    %v605 = vadd.f32 %v103, %v604
    %v606 = vpop.f32.mrb[0].mxu0
    %v607 = vadd.f32 %v107, %v606
    %608 = vmatprep.mubr.f32.mxu0 0.0
    %609 = vmatmul.mubr.f32.gmra.mrb[0].mxu0 %v153
    %v610 = vpop.f32.mrb[0].mxu0
    %v611 = vadd.f32 %v103, %v610
    %v612 = vpop.f32.mrb[0].mxu0
    %v613 = vadd.f32 %v107, %v612
    %614 = vmatprep.mubr.f32.mxu0 0.0
    %615 = vmatmul.mubr.f32.gmra.mrb[0].mxu0 %v156
    %v616 = vpop.f32.mrb[0].mxu0
    %v617 = vadd.f32 %v103, %v616
    %v618 = vpop.f32.mrb[0].mxu0
    %v619 = vadd.f32 %v107, %v618
    %620 = vmatprep.mubr.f32.mxu0 0.0
    %621 = vmatmul.mubr.f32.gmra.mrb[0].mxu0 %v159
    %v622 = vpop.f32.mrb[0].mxu0
    %v623 = vadd.f32 %v103, %v622
    %v624 = vpop.f32.mrb[0].mxu0
    %v625 = vadd.f32 %v107, %v624
    %626 = vmatprep.mubr.f32.mxu0 0.0
    %627 = vmatmul.mubr.f32.gmra.mrb[0].mxu0 %v162
    %v628 = vpop.f32.mrb[0].mxu0
    %v629 = vadd.f32 %v103, %v628
    %v630 = vpop.f32.mrb[0].mxu0
    %v631 = vadd.f32 %v107, %v630
    %632 = vmatprep.mubr.f32.mxu0 0.0
    %633 = vmatmul.mubr.f32.gmra.mrb[0].mxu0 %v165
    %v634 = vpop.f32.mrb[0].mxu0
    %v635 = vadd.f32 %v103, %v634
    %v636 = vpop.f32.mrb[0].mxu0
    %v637 = vadd.f32 %v107, %v636
    %638 = vmatprep.mubr.f32.mxu0 0.0
    %639 = vmatmul.mubr.f32.gmra.mrb[0].mxu0 %v168
    %v640 = vpop.f32.mrb[0].mxu0
    %v641 = vadd.f32 %v103, %v640
    %v642 = vpop.f32.mrb[0].mxu0
    %v643 = vadd.f32 %v107, %v642
    %644 = vmatprep.mubr.f32.mxu0 0.0
    %645 = vmatmul.mubr.f32.gmra.mrb[0].mxu0 %v171
    %v646 = vpop.f32.mrb[0].mxu0
    %v647 = vadd.f32 %v103, %v646
    %v648 = vpop.f32.mrb[0].mxu0
    %v649 = vadd.f32 %v107, %v648
    %650 = vmatprep.mubr.f32.mxu0 0.0
    %651 = vmatmul.mubr.f32.gmra.mrb[0].mxu0 %v174
    %v652 = vpop.f32.mrb[0].mxu0
    %v653 = vadd.f32 %v103, %v652
    %v654 = vpop.f32.mrb[0].mxu0
    %v655 = vadd.f32 %v107, %v654
    %656 = vmatprep.mubr.f32.mxu0 0.0
    %657 = vmatmul.mubr.f32.gmra.mrb[0].mxu0 %v177
    %v658 = vpop.f32.mrb[0].mxu0
    %v659 = vadd.f32 %v103, %v658
    %v660 = vpop.f32.mrb[0].mxu0
    %v661 = vadd.f32 %v107, %v660
    %662 = vmatprep.mubr.f32.mxu0 0.0
    %663 = vmatmul.mubr.f32.gmra.mrb[0].mxu0 %v180
    %v664 = vpop.f32.mrb[0].mxu0
    %v665 = vadd.f32 %v103, %v664
    %v666 = vpop.f32.mrb[0].mxu0
    %v667 = vadd.f32 %v107, %v666
    %668 = vmatprep.mubr.f32.mxu0 0.0
    %669 = vmatmul.mubr.f32.gmra.mrb[0].mxu0 %v183
    %v670 = vpop.f32.mrb[0].mxu0
    %v671 = vadd.f32 %v103, %v670
    %v672 = vpop.f32.mrb[0].mxu0
    %v673 = vadd.f32 %v107, %v672
    %674 = vmatprep.mubr.f32.mxu0 0.0
    %675 = vmatmul.mubr.f32.gmra.mrb[0].mxu0 %v186
    %v676 = vpop.f32.mrb[0].mxu0
    %v677 = vadd.f32 %v103, %v676
    %v678 = vpop.f32.mrb[0].mxu0
    %v679 = vadd.f32 %v107, %v678
    %680 = vmatprep.mubr.f32.mxu0 0.0
    %681 = vmatmul.mubr.f32.gmra.mrb[0].mxu0 %v189
    %v682 = vpop.f32.mrb[0].mxu0
    %v683 = vadd.f32 %v103, %v682
    %v684 = vpop.f32.mrb[0].mxu0
    %v685 = vadd.f32 %v107, %v684
    %686 = vmatprep.mubr.f32.mxu0 0.0
    %687 = vmatmul.mubr.f32.gmra.mrb[0].mxu0 %v192
    %v688 = vpop.f32.mrb[0].mxu0
    %v689 = vadd.f32 %v103, %v688
    %v690 = vpop.f32.mrb[0].mxu0
    %v691 = vadd.f32 %v107, %v690
    %692 = vmatprep.mubr.f32.mxu0 0.0
    %693 = vmatmul.mubr.f32.gmra.mrb[0].mxu0 %v195
    %v694 = vpop.f32.mrb[0].mxu0
    %v695 = vadd.f32 %v103, %v694
    %v696 = vpop.f32.mrb[0].mxu0
    %v697 = vadd.f32 %v107, %v696
    %698 = vmatprep.mubr.f32.mxu0 0.0
    %699 = vmatmul.mubr.f32.gmra.mrb[0].mxu0 %v198
    %v700 = vpop.f32.mrb[0].mxu0
    %v701 = vadd.f32 %v103, %v700
    %v702 = vpop.f32.mrb[0].mxu0
    %v703 = vadd.f32 %v107, %v702
    %704 = vmatprep.mubr.f32.mxu0 0.0
    %705 = vmatmul.mubr.f32.gmra.mrb[0].mxu0 %v201
    %v706 = vpop.f32.mrb[0].mxu0
    %v707 = vadd.f32 %v103, %v706
    %v708 = vpop.f32.mrb[0].mxu0
    %v709 = vadd.f32 %v107, %v708
    %710 = vmatprep.mubr.f32.mxu0 0.0
    %711 = vmatmul.mubr.f32.gmra.mrb[0].mxu0 %v204
    %v712 = vpop.f32.mrb[0].mxu0
    %v713 = vadd.f32 %v103, %v712
    %v714 = vpop.f32.mrb[0].mxu0
    %v715 = vadd.f32 %v107, %v714
    %716 = vmatprep.mubr.f32.mxu0 0.0
    %717 = vmatmul.mubr.f32.gmra.mrb[0].mxu0 %v207
    %v718 = vpop.f32.mrb[0].mxu0
    %v719 = vadd.f32 %v103, %v718
    %v720 = vpop.f32.mrb[0].mxu0
    %v721 = vadd.f32 %v107, %v720
    %722 = vdwg.mxu0
    %v723 = vmax.f32 %v276, 0.0
    %v724 = vmax.f32 %v278, 0.0
    %v725 = vmax.f32 %v533, 0.0
    %v726 = vmax.f32 %v535, 0.0
    %v727 = vmax.f32 %v282, 0.0
    %v728 = vmax.f32 %v284, 0.0
    %v729 = vmax.f32 %v539, 0.0
    %v730 = vmax.f32 %v541, 0.0
    %v731 = vmax.f32 %v288, 0.0
    %v732 = vmax.f32 %v290, 0.0
    %v733 = vmax.f32 %v545, 0.0
    %v734 = vmax.f32 %v547, 0.0
    %v735 = vmax.f32 %v294, 0.0
    %v736 = vmax.f32 %v296, 0.0
    %v737 = vmax.f32 %v551, 0.0
    %v738 = vmax.f32 %v553, 0.0
    %v739 = vmax.f32 %v300, 0.0
    %v740 = vmax.f32 %v302, 0.0
    %v741 = vmax.f32 %v557, 0.0
    %v742 = vmax.f32 %v559, 0.0
    %v743 = vmax.f32 %v306, 0.0
    %v744 = vmax.f32 %v308, 0.0
    %v745 = vmax.f32 %v563, 0.0
    %v746 = vmax.f32 %v565, 0.0
    %v747 = vmax.f32 %v312, 0.0
    %v748 = vmax.f32 %v314, 0.0
    %v749 = vmax.f32 %v569, 0.0
    %v750 = vmax.f32 %v571, 0.0
    %v751 = vmax.f32 %v318, 0.0
    %v752 = vmax.f32 %v320, 0.0
    %v753 = vmax.f32 %v575, 0.0
    %v754 = vmax.f32 %v577, 0.0
    %v755 = vmax.f32 %v324, 0.0
    %v756 = vmax.f32 %v326, 0.0
    %v757 = vmax.f32 %v581, 0.0
    %v758 = vmax.f32 %v583, 0.0
    %v759 = vmax.f32 %v330, 0.0
    %v760 = vmax.f32 %v332, 0.0
    %v761 = vmax.f32 %v587, 0.0
    %v762 = vmax.f32 %v589, 0.0
    %v763 = vmax.f32 %v336, 0.0
    %v764 = vmax.f32 %v338, 0.0
    %v765 = vmax.f32 %v593, 0.0
    %v766 = vmax.f32 %v595, 0.0
    %v767 = vmax.f32 %v342, 0.0
    %v768 = vmax.f32 %v344, 0.0
    %v769 = vmax.f32 %v599, 0.0
    %v770 = vmax.f32 %v601, 0.0
    %v771 = vmax.f32 %v348, 0.0
    %v772 = vmax.f32 %v350, 0.0
    %v773 = vmax.f32 %v605, 0.0
    %v774 = vmax.f32 %v607, 0.0
    %v775 = vmax.f32 %v354, 0.0
    %v776 = vmax.f32 %v356, 0.0
    %v777 = vmax.f32 %v611, 0.0
    %v778 = vmax.f32 %v613, 0.0
    %v779 = vmax.f32 %v360, 0.0
    %v780 = vmax.f32 %v362, 0.0
    %v781 = vmax.f32 %v617, 0.0
    %v782 = vmax.f32 %v619, 0.0
    %v783 = vmax.f32 %v366, 0.0
    %v784 = vmax.f32 %v368, 0.0
    %v785 = vmax.f32 %v623, 0.0
    %v786 = vmax.f32 %v625, 0.0
    %v787 = vmax.f32 %v372, 0.0
    %v788 = vmax.f32 %v374, 0.0
    %v789 = vmax.f32 %v629, 0.0
    %v790 = vmax.f32 %v631, 0.0
    %v791 = vmax.f32 %v378, 0.0
    %v792 = vmax.f32 %v380, 0.0
    %v793 = vmax.f32 %v635, 0.0
    %v794 = vmax.f32 %v637, 0.0
    %v795 = vmax.f32 %v384, 0.0
    %v796 = vmax.f32 %v386, 0.0
    %v797 = vmax.f32 %v641, 0.0
    %v798 = vmax.f32 %v643, 0.0
    %v799 = vmax.f32 %v390, 0.0
    %v800 = vmax.f32 %v392, 0.0
    %v801 = vmax.f32 %v647, 0.0
    %v802 = vmax.f32 %v649, 0.0
    %v803 = vmax.f32 %v396, 0.0
    %v804 = vmax.f32 %v398, 0.0
    %v805 = vmax.f32 %v653, 0.0
    %v806 = vmax.f32 %v655, 0.0
    %v807 = vmax.f32 %v402, 0.0
    %v808 = vmax.f32 %v404, 0.0
    %v809 = vmax.f32 %v659, 0.0
    %v810 = vmax.f32 %v661, 0.0
    %v811 = vmax.f32 %v408, 0.0
    %v812 = vmax.f32 %v410, 0.0
    %v813 = vmax.f32 %v665, 0.0
    %v814 = vmax.f32 %v667, 0.0
    %v815 = vmax.f32 %v414, 0.0
    %v816 = vmax.f32 %v416, 0.0
    %v817 = vmax.f32 %v671, 0.0
    %v818 = vmax.f32 %v673, 0.0
    %v819 = vmax.f32 %v420, 0.0
    %v820 = vmax.f32 %v422, 0.0
    %v821 = vmax.f32 %v677, 0.0
    %v822 = vmax.f32 %v679, 0.0
    %v823 = vmax.f32 %v426, 0.0
    %v824 = vmax.f32 %v428, 0.0
    %v825 = vmax.f32 %v683, 0.0
    %v826 = vmax.f32 %v685, 0.0
    %v827 = vmax.f32 %v432, 0.0
    %v828 = vmax.f32 %v434, 0.0
    %v829 = vmax.f32 %v689, 0.0
    %v830 = vmax.f32 %v691, 0.0
    %v831 = vmax.f32 %v438, 0.0
    %v832 = vmax.f32 %v440, 0.0
    %v833 = vmax.f32 %v695, 0.0
    %v834 = vmax.f32 %v697, 0.0
    %v835 = vmax.f32 %v444, 0.0
    %v836 = vmax.f32 %v446, 0.0
    %v837 = vmax.f32 %v701, 0.0
    %v838 = vmax.f32 %v703, 0.0
    %v839 = vmax.f32 %v450, 0.0
    %v840 = vmax.f32 %v452, 0.0
    %v841 = vmax.f32 %v707, 0.0
    %v842 = vmax.f32 %v709, 0.0
    %v843 = vmax.f32 %v456, 0.0
    %v844 = vmax.f32 %v458, 0.0
    %v845 = vmax.f32 %v713, 0.0
    %v846 = vmax.f32 %v715, 0.0
    %v847 = vmax.f32 %v462, 0.0
    %v848 = vmax.f32 %v464, 0.0
    %v849 = vmax.f32 %v719, 0.0
    %v850 = vmax.f32 %v721, 0.0
    %v851 = vld [vmem:[#allocation3] sm:$0xff]
    %v852 = vld [vmem:[#allocation3 + $0x8] sm:$0xff]
    %v853 = vld [vmem:[#allocation3 + $0x10] sm:$0xff]
    %v854 = vld [vmem:[#allocation3 + $0x18] sm:$0xff]
    %v855 = vld [vmem:[#allocation3 + $0x20] sm:$0xff]
    %v856 = vld [vmem:[#allocation3 + $0x28] sm:$0xff]
    %v857 = vld [vmem:[#allocation3 + $0x30] sm:$0xff]
    %v858 = vld [vmem:[#allocation3 + $0x38] sm:$0xff]
    %v859 = vld [vmem:[#allocation3 + $0x40] sm:$0xff]
    %v860 = vld [vmem:[#allocation3 + $0x48] sm:$0xff]
    %v861 = vld [vmem:[#allocation3 + $0x50] sm:$0xff]
    %v862 = vld [vmem:[#allocation3 + $0x58] sm:$0xff]
    %v863 = vld [vmem:[#allocation3 + $0x60] sm:$0xff]
    %v864 = vld [vmem:[#allocation3 + $0x68] sm:$0xff]
    %v865 = vld [vmem:[#allocation3 + $0x70] sm:$0xff]
    %v866 = vld [vmem:[#allocation3 + $0x78] sm:$0xff]
    %v867 = vld [vmem:[#allocation3 + $0x80] sm:$0xff]
    %v868 = vld [vmem:[#allocation3 + $0x88] sm:$0xff]
    %v869 = vld [vmem:[#allocation3 + $0x90] sm:$0xff]
    %v870 = vld [vmem:[#allocation3 + $0x98] sm:$0xff]
    %v871 = vld [vmem:[#allocation3 + $0xa0] sm:$0xff]
    %v872 = vld [vmem:[#allocation3 + $0xa8] sm:$0xff]
    %v873 = vld [vmem:[#allocation3 + $0xb0] sm:$0xff]
    %v874 = vld [vmem:[#allocation3 + $0xb8] sm:$0xff]
    %v875 = vld [vmem:[#allocation3 + $0xc0] sm:$0xff]
    %v876 = vld [vmem:[#allocation3 + $0xc8] sm:$0xff]
    %v877 = vld [vmem:[#allocation3 + $0xd0] sm:$0xff]
    %v878 = vld [vmem:[#allocation3 + $0xd8] sm:$0xff]
    %v879 = vld [vmem:[#allocation3 + $0xe0] sm:$0xff]
    %v880 = vld [vmem:[#allocation3 + $0xe8] sm:$0xff]
    %v881 = vld [vmem:[#allocation3 + $0xf0] sm:$0xff]
    %v882 = vld [vmem:[#allocation3 + $0xf8] sm:$0xff]
    %v883 = vld [vmem:[#allocation3 + $0x100] sm:$0xff]
    %v884 = vld [vmem:[#allocation3 + $0x108] sm:$0xff]
    %v885 = vld [vmem:[#allocation3 + $0x110] sm:$0xff]
    %v886 = vld [vmem:[#allocation3 + $0x118] sm:$0xff]
    %v887 = vld [vmem:[#allocation3 + $0x120] sm:$0xff]
    %v888 = vld [vmem:[#allocation3 + $0x128] sm:$0xff]
    %v889 = vld [vmem:[#allocation3 + $0x130] sm:$0xff]
    %v890 = vld [vmem:[#allocation3 + $0x138] sm:$0xff]
    %v891 = vld [vmem:[#allocation3 + $0x140] sm:$0xff]
    %v892 = vld [vmem:[#allocation3 + $0x148] sm:$0xff]
    %v893 = vld [vmem:[#allocation3 + $0x150] sm:$0xff]
    %v894 = vld [vmem:[#allocation3 + $0x158] sm:$0xff]
    %v895 = vld [vmem:[#allocation3 + $0x160] sm:$0xff]
    %v896 = vld [vmem:[#allocation3 + $0x168] sm:$0xff]
    %v897 = vld [vmem:[#allocation3 + $0x170] sm:$0xff]
    %v898 = vld [vmem:[#allocation3 + $0x178] sm:$0xff]
    %v899 = vld [vmem:[#allocation3 + $0x180] sm:$0xff]
    %v900 = vld [vmem:[#allocation3 + $0x188] sm:$0xff]
    %v901 = vld [vmem:[#allocation3 + $0x190] sm:$0xff]
    %v902 = vld [vmem:[#allocation3 + $0x198] sm:$0xff]
    %v903 = vld [vmem:[#allocation3 + $0x1a0] sm:$0xff]
    %v904 = vld [vmem:[#allocation3 + $0x1a8] sm:$0xff]
    %v905 = vld [vmem:[#allocation3 + $0x1b0] sm:$0xff]
    %v906 = vld [vmem:[#allocation3 + $0x1b8] sm:$0xff]
    %v907 = vld [vmem:[#allocation3 + $0x1c0] sm:$0xff]
    %v908 = vld [vmem:[#allocation3 + $0x1c8] sm:$0xff]
    %v909 = vld [vmem:[#allocation3 + $0x1d0] sm:$0xff]
    %v910 = vld [vmem:[#allocation3 + $0x1d8] sm:$0xff]
    %v911 = vld [vmem:[#allocation3 + $0x1e0] sm:$0xff]
    %v912 = vld [vmem:[#allocation3 + $0x1e8] sm:$0xff]
    %v913 = vld [vmem:[#allocation3 + $0x1f0] sm:$0xff]
    %v914 = vld [vmem:[#allocation3 + $0x1f8] sm:$0xff]
    %v915 = vld [vmem:[#allocation3 + $0x200] sm:$0xff]
    %v916 = vld [vmem:[#allocation3 + $0x208] sm:$0xff]
    %v917 = vld [vmem:[#allocation3 + $0x210] sm:$0xff]
    %v918 = vld [vmem:[#allocation3 + $0x218] sm:$0xff]
    %v919 = vld [vmem:[#allocation3 + $0x220] sm:$0xff]
    %v920 = vld [vmem:[#allocation3 + $0x228] sm:$0xff]
    %v921 = vld [vmem:[#allocation3 + $0x230] sm:$0xff]
    %v922 = vld [vmem:[#allocation3 + $0x238] sm:$0xff]
    %v923 = vld [vmem:[#allocation3 + $0x240] sm:$0xff]
    %v924 = vld [vmem:[#allocation3 + $0x248] sm:$0xff]
    %v925 = vld [vmem:[#allocation3 + $0x250] sm:$0xff]
    %v926 = vld [vmem:[#allocation3 + $0x258] sm:$0xff]
    %v927 = vld [vmem:[#allocation3 + $0x260] sm:$0xff]
    %v928 = vld [vmem:[#allocation3 + $0x268] sm:$0xff]
    %v929 = vld [vmem:[#allocation3 + $0x270] sm:$0xff]
    %v930 = vld [vmem:[#allocation3 + $0x278] sm:$0xff]
    %v931 = vld [vmem:[#allocation3 + $0x280] sm:$0xff]
    %v932 = vld [vmem:[#allocation3 + $0x288] sm:$0xff]
    %v933 = vld [vmem:[#allocation3 + $0x290] sm:$0xff]
    %v934 = vld [vmem:[#allocation3 + $0x298] sm:$0xff]
    %v935 = vld [vmem:[#allocation3 + $0x2a0] sm:$0xff]
    %v936 = vld [vmem:[#allocation3 + $0x2a8] sm:$0xff]
    %v937 = vld [vmem:[#allocation3 + $0x2b0] sm:$0xff]
    %v938 = vld [vmem:[#allocation3 + $0x2b8] sm:$0xff]
    %v939 = vld [vmem:[#allocation3 + $0x2c0] sm:$0xff]
    %v940 = vld [vmem:[#allocation3 + $0x2c8] sm:$0xff]
    %v941 = vld [vmem:[#allocation3 + $0x2d0] sm:$0xff]
    %v942 = vld [vmem:[#allocation3 + $0x2d8] sm:$0xff]
    %v943 = vld [vmem:[#allocation3 + $0x2e0] sm:$0xff]
    %v944 = vld [vmem:[#allocation3 + $0x2e8] sm:$0xff]
    %v945 = vld [vmem:[#allocation3 + $0x2f0] sm:$0xff]
    %v946 = vld [vmem:[#allocation3 + $0x2f8] sm:$0xff]
    %v947 = vld [vmem:[#allocation3 + $0x300] sm:$0xff]
    %v948 = vld [vmem:[#allocation3 + $0x308] sm:$0xff]
    %v949 = vld [vmem:[#allocation3 + $0x310] sm:$0xff]
    %v950 = vld [vmem:[#allocation3 + $0x318] sm:$0xff]
    %v951 = vld [vmem:[#allocation3 + $0x320] sm:$0xff]
    %v952 = vld [vmem:[#allocation3 + $0x328] sm:$0xff]
    %v953 = vld [vmem:[#allocation3 + $0x330] sm:$0xff]
    %v954 = vld [vmem:[#allocation3 + $0x338] sm:$0xff]
    %v955 = vld [vmem:[#allocation3 + $0x340] sm:$0xff]
    %v956 = vld [vmem:[#allocation3 + $0x348] sm:$0xff]
    %v957 = vld [vmem:[#allocation3 + $0x350] sm:$0xff]
    %v958 = vld [vmem:[#allocation3 + $0x358] sm:$0xff]
    %v959 = vld [vmem:[#allocation3 + $0x360] sm:$0xff]
    %v960 = vld [vmem:[#allocation3 + $0x368] sm:$0xff]
    %v961 = vld [vmem:[#allocation3 + $0x370] sm:$0xff]
    %v962 = vld [vmem:[#allocation3 + $0x378] sm:$0xff]
    %v963 = vld [vmem:[#allocation3 + $0x380] sm:$0xff]
    %v964 = vld [vmem:[#allocation3 + $0x388] sm:$0xff]
    %v965 = vld [vmem:[#allocation3 + $0x390] sm:$0xff]
    %v966 = vld [vmem:[#allocation3 + $0x398] sm:$0xff]
    %v967 = vld [vmem:[#allocation3 + $0x3a0] sm:$0xff]
    %v968 = vld [vmem:[#allocation3 + $0x3a8] sm:$0xff]
    %v969 = vld [vmem:[#allocation3 + $0x3b0] sm:$0xff]
    %v970 = vld [vmem:[#allocation3 + $0x3b8] sm:$0xff]
    %v971 = vld [vmem:[#allocation3 + $0x3c0] sm:$0xff]
    %v972 = vld [vmem:[#allocation3 + $0x3c8] sm:$0xff]
    %v973 = vld [vmem:[#allocation3 + $0x3d0] sm:$0xff]
    %v974 = vld [vmem:[#allocation3 + $0x3d8] sm:$0xff]
    %v975 = vld [vmem:[#allocation3 + $0x3e0] sm:$0xff]
    %v976 = vld [vmem:[#allocation3 + $0x3e8] sm:$0xff]
    %v977 = vld [vmem:[#allocation3 + $0x3f0] sm:$0xff]
    %v978 = vld [vmem:[#allocation3 + $0x3f8] sm:$0xff]
    %v979 = vld [vmem:[%s4] sm:$0x3]
    %v981 = vlaneseq
    %v982 = vshrl.u32 %v981, 7
    %v983 = vsub.s32 0, %v982
    %v984 = vrot.slane %v979, %v983
    %v985 = vlaneseq
    %v986 = vshrl.u32 %v985, 7
    %v987 = vsub.s32 1, %v986
    %v988 = vrot.slane %v979, %v987
    %991 = vmatprep.subr.mxu0 %v852
    %992 = vmatpush1.msra.mxu0 %v851
    %993 = vmatprep.subr.mxu0 %v854
    %994 = vmatpush1.msra.mxu0 %v853
    %995 = vmatprep.subr.mxu0 %v856
    %996 = vmatpush1.msra.mxu0 %v855
    %997 = vmatprep.subr.mxu0 %v858
    %998 = vmatpush1.msra.mxu0 %v857
    %999 = vmatprep.subr.mxu0 %v860
    %1000 = vmatpush1.msra.mxu0 %v859
    %1001 = vmatprep.subr.mxu0 %v862
    %1002 = vmatpush1.msra.mxu0 %v861
    %1003 = vmatprep.subr.mxu0 %v864
    %1004 = vmatpush1.msra.mxu0 %v863
    %1005 = vmatprep.subr.mxu0 %v866
    %1006 = vmatpush1.msra.mxu0 %v865
    %1007 = vmatprep.subr.mxu0 %v868
    %1008 = vmatpush1.msra.mxu0 %v867
    %1009 = vmatprep.subr.mxu0 %v870
    %1010 = vmatpush1.msra.mxu0 %v869
    %1011 = vmatprep.subr.mxu0 %v872
    %1012 = vmatpush1.msra.mxu0 %v871
    %1013 = vmatprep.subr.mxu0 %v874
    %1014 = vmatpush1.msra.mxu0 %v873
    %1015 = vmatprep.subr.mxu0 %v876
    %1016 = vmatpush1.msra.mxu0 %v875
    %1017 = vmatprep.subr.mxu0 %v878
    %1018 = vmatpush1.msra.mxu0 %v877
    %1019 = vmatprep.subr.mxu0 %v880
    %1020 = vmatpush1.msra.mxu0 %v879
    %1021 = vmatprep.subr.mxu0 %v882
    %1022 = vmatpush1.msra.mxu0 %v881
    %1023 = vmatprep.subr.mxu0 %v884
    %1024 = vmatpush1.msra.mxu0 %v883
    %1025 = vmatprep.subr.mxu0 %v886
    %1026 = vmatpush1.msra.mxu0 %v885
    %1027 = vmatprep.subr.mxu0 %v888
    %1028 = vmatpush1.msra.mxu0 %v887
    %1029 = vmatprep.subr.mxu0 %v890
    %1030 = vmatpush1.msra.mxu0 %v889
    %1031 = vmatprep.subr.mxu0 %v892
    %1032 = vmatpush1.msra.mxu0 %v891
    %1033 = vmatprep.subr.mxu0 %v894
    %1034 = vmatpush1.msra.mxu0 %v893
    %1035 = vmatprep.subr.mxu0 %v896
    %1036 = vmatpush1.msra.mxu0 %v895
    %1037 = vmatprep.subr.mxu0 %v898
    %1038 = vmatpush1.msra.mxu0 %v897
    %1039 = vmatprep.subr.mxu0 %v900
    %1040 = vmatpush1.msra.mxu0 %v899
    %1041 = vmatprep.subr.mxu0 %v902
    %1042 = vmatpush1.msra.mxu0 %v901
    %1043 = vmatprep.subr.mxu0 %v904
    %1044 = vmatpush1.msra.mxu0 %v903
    %1045 = vmatprep.subr.mxu0 %v906
    %1046 = vmatpush1.msra.mxu0 %v905
    %1047 = vmatprep.subr.mxu0 %v908
    %1048 = vmatpush1.msra.mxu0 %v907
    %1049 = vmatprep.subr.mxu0 %v910
    %1050 = vmatpush1.msra.mxu0 %v909
    %1051 = vmatprep.subr.mxu0 %v912
    %1052 = vmatpush1.msra.mxu0 %v911
    %1053 = vmatprep.subr.mxu0 %v914
    %1054 = vmatpush1.msra.mxu0 %v913
    %1055 = vmatprep.mubr.f32.mxu0 %v724
    %1056 = vmatmul.mubr.f32.gmra.mrb[0].mxu0 %v723
    %v1057 = vpop.f32.mrb[0].mxu0
    %v1058 = vadd.f32 %v984, %v1057
    %v1059 = vpop.f32.mrb[0].mxu0
    %v1060 = vadd.f32 %v988, %v1059
    %1061 = vmatprep.mubr.f32.mxu0 %v728
    %1062 = vmatmul.mubr.f32.gmra.mrb[0].mxu0 %v727
    %v1063 = vpop.f32.mrb[0].mxu0
    %v1064 = vadd.f32 %v984, %v1063
    %v1065 = vpop.f32.mrb[0].mxu0
    %v1066 = vadd.f32 %v988, %v1065
    %1067 = vmatprep.mubr.f32.mxu0 %v732
    %1068 = vmatmul.mubr.f32.gmra.mrb[0].mxu0 %v731
    %v1069 = vpop.f32.mrb[0].mxu0
    %v1070 = vadd.f32 %v984, %v1069
    %v1071 = vpop.f32.mrb[0].mxu0
    %v1072 = vadd.f32 %v988, %v1071
    %1073 = vmatprep.mubr.f32.mxu0 %v736
    %1074 = vmatmul.mubr.f32.gmra.mrb[0].mxu0 %v735
    %v1075 = vpop.f32.mrb[0].mxu0
    %v1076 = vadd.f32 %v984, %v1075
    %v1077 = vpop.f32.mrb[0].mxu0
    %v1078 = vadd.f32 %v988, %v1077
    %1079 = vmatprep.mubr.f32.mxu0 %v740
    %1080 = vmatmul.mubr.f32.gmra.mrb[0].mxu0 %v739
    %v1081 = vpop.f32.mrb[0].mxu0
    %v1082 = vadd.f32 %v984, %v1081
    %v1083 = vpop.f32.mrb[0].mxu0
    %v1084 = vadd.f32 %v988, %v1083
    %1085 = vmatprep.mubr.f32.mxu0 %v744
    %1086 = vmatmul.mubr.f32.gmra.mrb[0].mxu0 %v743
    %v1087 = vpop.f32.mrb[0].mxu0
    %v1088 = vadd.f32 %v984, %v1087
    %v1089 = vpop.f32.mrb[0].mxu0
    %v1090 = vadd.f32 %v988, %v1089
    %1091 = vmatprep.mubr.f32.mxu0 %v748
    %1092 = vmatmul.mubr.f32.gmra.mrb[0].mxu0 %v747
    %v1093 = vpop.f32.mrb[0].mxu0
    %v1094 = vadd.f32 %v984, %v1093
    %v1095 = vpop.f32.mrb[0].mxu0
    %v1096 = vadd.f32 %v988, %v1095
    %1097 = vmatprep.mubr.f32.mxu0 %v752
    %1098 = vmatmul.mubr.f32.gmra.mrb[0].mxu0 %v751
    %v1099 = vpop.f32.mrb[0].mxu0
    %v1100 = vadd.f32 %v984, %v1099
    %v1101 = vpop.f32.mrb[0].mxu0
    %v1102 = vadd.f32 %v988, %v1101
    %1103 = vmatprep.mubr.f32.mxu0 %v756
    %1104 = vmatmul.mubr.f32.gmra.mrb[0].mxu0 %v755
    %v1105 = vpop.f32.mrb[0].mxu0
    %v1106 = vadd.f32 %v984, %v1105
    %v1107 = vpop.f32.mrb[0].mxu0
    %v1108 = vadd.f32 %v988, %v1107
    %1109 = vmatprep.mubr.f32.mxu0 %v760
    %1110 = vmatmul.mubr.f32.gmra.mrb[0].mxu0 %v759
    %v1111 = vpop.f32.mrb[0].mxu0
    %v1112 = vadd.f32 %v984, %v1111
    %v1113 = vpop.f32.mrb[0].mxu0
    %v1114 = vadd.f32 %v988, %v1113
    %1115 = vmatprep.mubr.f32.mxu0 %v764
    %1116 = vmatmul.mubr.f32.gmra.mrb[0].mxu0 %v763
    %v1117 = vpop.f32.mrb[0].mxu0
    %v1118 = vadd.f32 %v984, %v1117
    %v1119 = vpop.f32.mrb[0].mxu0
    %v1120 = vadd.f32 %v988, %v1119
    %1121 = vmatprep.mubr.f32.mxu0 %v768
    %1122 = vmatmul.mubr.f32.gmra.mrb[0].mxu0 %v767
    %v1123 = vpop.f32.mrb[0].mxu0
    %v1124 = vadd.f32 %v984, %v1123
    %v1125 = vpop.f32.mrb[0].mxu0
    %v1126 = vadd.f32 %v988, %v1125
    %1127 = vmatprep.mubr.f32.mxu0 %v772
    %1128 = vmatmul.mubr.f32.gmra.mrb[0].mxu0 %v771
    %v1129 = vpop.f32.mrb[0].mxu0
    %v1130 = vadd.f32 %v984, %v1129
    %v1131 = vpop.f32.mrb[0].mxu0
    %v1132 = vadd.f32 %v988, %v1131
    %1133 = vmatprep.mubr.f32.mxu0 %v776
    %1134 = vmatmul.mubr.f32.gmra.mrb[0].mxu0 %v775
    %v1135 = vpop.f32.mrb[0].mxu0
    %v1136 = vadd.f32 %v984, %v1135
    %v1137 = vpop.f32.mrb[0].mxu0
    %v1138 = vadd.f32 %v988, %v1137
    %1139 = vmatprep.mubr.f32.mxu0 %v780
    %1140 = vmatmul.mubr.f32.gmra.mrb[0].mxu0 %v779
    %v1141 = vpop.f32.mrb[0].mxu0
    %v1142 = vadd.f32 %v984, %v1141
    %v1143 = vpop.f32.mrb[0].mxu0
    %v1144 = vadd.f32 %v988, %v1143
    %1145 = vmatprep.mubr.f32.mxu0 %v784
    %1146 = vmatmul.mubr.f32.gmra.mrb[0].mxu0 %v783
    %v1147 = vpop.f32.mrb[0].mxu0
    %v1148 = vadd.f32 %v984, %v1147
    %v1149 = vpop.f32.mrb[0].mxu0
    %v1150 = vadd.f32 %v988, %v1149
    %1151 = vmatprep.mubr.f32.mxu0 %v788
    %1152 = vmatmul.mubr.f32.gmra.mrb[0].mxu0 %v787
    %v1153 = vpop.f32.mrb[0].mxu0
    %v1154 = vadd.f32 %v984, %v1153
    %v1155 = vpop.f32.mrb[0].mxu0
    %v1156 = vadd.f32 %v988, %v1155
    %1157 = vmatprep.mubr.f32.mxu0 %v792
    %1158 = vmatmul.mubr.f32.gmra.mrb[0].mxu0 %v791
    %v1159 = vpop.f32.mrb[0].mxu0
    %v1160 = vadd.f32 %v984, %v1159
    %v1161 = vpop.f32.mrb[0].mxu0
    %v1162 = vadd.f32 %v988, %v1161
    %1163 = vmatprep.mubr.f32.mxu0 %v796
    %1164 = vmatmul.mubr.f32.gmra.mrb[0].mxu0 %v795
    %v1165 = vpop.f32.mrb[0].mxu0
    %v1166 = vadd.f32 %v984, %v1165
    %v1167 = vpop.f32.mrb[0].mxu0
    %v1168 = vadd.f32 %v988, %v1167
    %1169 = vmatprep.mubr.f32.mxu0 %v800
    %1170 = vmatmul.mubr.f32.gmra.mrb[0].mxu0 %v799
    %v1171 = vpop.f32.mrb[0].mxu0
    %v1172 = vadd.f32 %v984, %v1171
    %v1173 = vpop.f32.mrb[0].mxu0
    %v1174 = vadd.f32 %v988, %v1173
    %1175 = vmatprep.mubr.f32.mxu0 %v804
    %1176 = vmatmul.mubr.f32.gmra.mrb[0].mxu0 %v803
    %v1177 = vpop.f32.mrb[0].mxu0
    %v1178 = vadd.f32 %v984, %v1177
    %v1179 = vpop.f32.mrb[0].mxu0
    %v1180 = vadd.f32 %v988, %v1179
    %1181 = vmatprep.mubr.f32.mxu0 %v808
    %1182 = vmatmul.mubr.f32.gmra.mrb[0].mxu0 %v807
    %v1183 = vpop.f32.mrb[0].mxu0
    %v1184 = vadd.f32 %v984, %v1183
    %v1185 = vpop.f32.mrb[0].mxu0
    %v1186 = vadd.f32 %v988, %v1185
    %1187 = vmatprep.mubr.f32.mxu0 %v812
    %1188 = vmatmul.mubr.f32.gmra.mrb[0].mxu0 %v811
    %v1189 = vpop.f32.mrb[0].mxu0
    %v1190 = vadd.f32 %v984, %v1189
    %v1191 = vpop.f32.mrb[0].mxu0
    %v1192 = vadd.f32 %v988, %v1191
    %1193 = vmatprep.mubr.f32.mxu0 %v816
    %1194 = vmatmul.mubr.f32.gmra.mrb[0].mxu0 %v815
    %v1195 = vpop.f32.mrb[0].mxu0
    %v1196 = vadd.f32 %v984, %v1195
    %v1197 = vpop.f32.mrb[0].mxu0
    %v1198 = vadd.f32 %v988, %v1197
    %1199 = vmatprep.mubr.f32.mxu0 %v820
    %1200 = vmatmul.mubr.f32.gmra.mrb[0].mxu0 %v819
    %v1201 = vpop.f32.mrb[0].mxu0
    %v1202 = vadd.f32 %v984, %v1201
    %v1203 = vpop.f32.mrb[0].mxu0
    %v1204 = vadd.f32 %v988, %v1203
    %1205 = vmatprep.mubr.f32.mxu0 %v824
    %1206 = vmatmul.mubr.f32.gmra.mrb[0].mxu0 %v823
    %v1207 = vpop.f32.mrb[0].mxu0
    %v1208 = vadd.f32 %v984, %v1207
    %v1209 = vpop.f32.mrb[0].mxu0
    %v1210 = vadd.f32 %v988, %v1209
    %1211 = vmatprep.mubr.f32.mxu0 %v828
    %1212 = vmatmul.mubr.f32.gmra.mrb[0].mxu0 %v827
    %v1213 = vpop.f32.mrb[0].mxu0
    %v1214 = vadd.f32 %v984, %v1213
    %v1215 = vpop.f32.mrb[0].mxu0
    %v1216 = vadd.f32 %v988, %v1215
    %1217 = vmatprep.mubr.f32.mxu0 %v832
    %1218 = vmatmul.mubr.f32.gmra.mrb[0].mxu0 %v831
    %v1219 = vpop.f32.mrb[0].mxu0
    %v1220 = vadd.f32 %v984, %v1219
    %v1221 = vpop.f32.mrb[0].mxu0
    %v1222 = vadd.f32 %v988, %v1221
    %1223 = vmatprep.mubr.f32.mxu0 %v836
    %1224 = vmatmul.mubr.f32.gmra.mrb[0].mxu0 %v835
    %v1225 = vpop.f32.mrb[0].mxu0
    %v1226 = vadd.f32 %v984, %v1225
    %v1227 = vpop.f32.mrb[0].mxu0
    %v1228 = vadd.f32 %v988, %v1227
    %1229 = vmatprep.mubr.f32.mxu0 %v840
    %1230 = vmatmul.mubr.f32.gmra.mrb[0].mxu0 %v839
    %v1231 = vpop.f32.mrb[0].mxu0
    %v1232 = vadd.f32 %v984, %v1231
    %v1233 = vpop.f32.mrb[0].mxu0
    %v1234 = vadd.f32 %v988, %v1233
    %1235 = vmatprep.mubr.f32.mxu0 %v844
    %1236 = vmatmul.mubr.f32.gmra.mrb[0].mxu0 %v843
    %v1237 = vpop.f32.mrb[0].mxu0
    %v1238 = vadd.f32 %v984, %v1237
    %v1239 = vpop.f32.mrb[0].mxu0
    %v1240 = vadd.f32 %v988, %v1239
    %1241 = vmatprep.mubr.f32.mxu0 %v848
    %1242 = vmatmul.mubr.f32.gmra.mrb[0].mxu0 %v847
    %v1243 = vpop.f32.mrb[0].mxu0
    %v1244 = vadd.f32 %v984, %v1243
    %v1245 = vpop.f32.mrb[0].mxu0
    %v1246 = vadd.f32 %v988, %v1245
    %1247 = vdwg.mxu0
    %1248 = vmatprep.subr.mxu0 %v916
    %1249 = vmatpush1.msra.mxu0 %v915
    %1250 = vmatprep.subr.mxu0 %v918
    %1251 = vmatpush1.msra.mxu0 %v917
    %1252 = vmatprep.subr.mxu0 %v920
    %1253 = vmatpush1.msra.mxu0 %v919
    %1254 = vmatprep.subr.mxu0 %v922
    %1255 = vmatpush1.msra.mxu0 %v921
    %1256 = vmatprep.subr.mxu0 %v924
    %1257 = vmatpush1.msra.mxu0 %v923
    %1258 = vmatprep.subr.mxu0 %v926
    %1259 = vmatpush1.msra.mxu0 %v925
    %1260 = vmatprep.subr.mxu0 %v928
    %1261 = vmatpush1.msra.mxu0 %v927
    %1262 = vmatprep.subr.mxu0 %v930
    %1263 = vmatpush1.msra.mxu0 %v929
    %1264 = vmatprep.subr.mxu0 %v932
    %1265 = vmatpush1.msra.mxu0 %v931
    %1266 = vmatprep.subr.mxu0 %v934
    %1267 = vmatpush1.msra.mxu0 %v933
    %1268 = vmatprep.subr.mxu0 %v936
    %1269 = vmatpush1.msra.mxu0 %v935
    %1270 = vmatprep.subr.mxu0 %v938
    %1271 = vmatpush1.msra.mxu0 %v937
    %1272 = vmatprep.subr.mxu0 %v940
    %1273 = vmatpush1.msra.mxu0 %v939
    %1274 = vmatprep.subr.mxu0 %v942
    %1275 = vmatpush1.msra.mxu0 %v941
    %1276 = vmatprep.subr.mxu0 %v944
    %1277 = vmatpush1.msra.mxu0 %v943
    %1278 = vmatprep.subr.mxu0 %v946
    %1279 = vmatpush1.msra.mxu0 %v945
    %1280 = vmatprep.subr.mxu0 %v948
    %1281 = vmatpush1.msra.mxu0 %v947
    %1282 = vmatprep.subr.mxu0 %v950
    %1283 = vmatpush1.msra.mxu0 %v949
    %1284 = vmatprep.subr.mxu0 %v952
    %1285 = vmatpush1.msra.mxu0 %v951
    %1286 = vmatprep.subr.mxu0 %v954
    %1287 = vmatpush1.msra.mxu0 %v953
    %1288 = vmatprep.subr.mxu0 %v956
    %1289 = vmatpush1.msra.mxu0 %v955
    %1290 = vmatprep.subr.mxu0 %v958
    %1291 = vmatpush1.msra.mxu0 %v957
    %1292 = vmatprep.subr.mxu0 %v960
    %1293 = vmatpush1.msra.mxu0 %v959
    %1294 = vmatprep.subr.mxu0 %v962
    %1295 = vmatpush1.msra.mxu0 %v961
    %1296 = vmatprep.subr.mxu0 %v964
    %1297 = vmatpush1.msra.mxu0 %v963
    %1298 = vmatprep.subr.mxu0 %v966
    %1299 = vmatpush1.msra.mxu0 %v965
    %1300 = vmatprep.subr.mxu0 %v968
    %1301 = vmatpush1.msra.mxu0 %v967
    %1302 = vmatprep.subr.mxu0 %v970
    %1303 = vmatpush1.msra.mxu0 %v969
    %1304 = vmatprep.subr.mxu0 %v972
    %1305 = vmatpush1.msra.mxu0 %v971
    %1306 = vmatprep.subr.mxu0 %v974
    %1307 = vmatpush1.msra.mxu0 %v973
    %1308 = vmatprep.subr.mxu0 %v976
    %1309 = vmatpush1.msra.mxu0 %v975
    %1310 = vmatprep.subr.mxu0 %v978
    %1311 = vmatpush1.msra.mxu0 %v977
    %1312 = vmatprep.mubr.f32.mxu0 %v726
    %1313 = vmatmul.mubr.f32.gmra.mrb[0].mxu0 %v725
    %v1314 = vpop.f32.mrb[0].mxu0
    %v1315 = vadd.f32 %v1058, %v1314
    %v1316 = vpop.f32.mrb[0].mxu0
    %v1317 = vadd.f32 %v1060, %v1316
    %1318 = vmatprep.mubr.f32.mxu0 %v730
    %1319 = vmatmul.mubr.f32.gmra.mrb[0].mxu0 %v729
    %v1320 = vpop.f32.mrb[0].mxu0
    %v1321 = vadd.f32 %v1064, %v1320
    %v1322 = vpop.f32.mrb[0].mxu0
    %v1323 = vadd.f32 %v1066, %v1322
    %1324 = vmatprep.mubr.f32.mxu0 %v734
    %1325 = vmatmul.mubr.f32.gmra.mrb[0].mxu0 %v733
    %v1326 = vpop.f32.mrb[0].mxu0
    %v1327 = vadd.f32 %v1070, %v1326
    %v1328 = vpop.f32.mrb[0].mxu0
    %v1329 = vadd.f32 %v1072, %v1328
    %1330 = vmatprep.mubr.f32.mxu0 %v738
    %1331 = vmatmul.mubr.f32.gmra.mrb[0].mxu0 %v737
    %v1332 = vpop.f32.mrb[0].mxu0
    %v1333 = vadd.f32 %v1076, %v1332
    %v1334 = vpop.f32.mrb[0].mxu0
    %v1335 = vadd.f32 %v1078, %v1334
    %1336 = vmatprep.mubr.f32.mxu0 %v742
    %1337 = vmatmul.mubr.f32.gmra.mrb[0].mxu0 %v741
    %v1338 = vpop.f32.mrb[0].mxu0
    %v1339 = vadd.f32 %v1082, %v1338
    %v1340 = vpop.f32.mrb[0].mxu0
    %v1341 = vadd.f32 %v1084, %v1340
    %1342 = vmatprep.mubr.f32.mxu0 %v746
    %1343 = vmatmul.mubr.f32.gmra.mrb[0].mxu0 %v745
    %v1344 = vpop.f32.mrb[0].mxu0
    %v1345 = vadd.f32 %v1088, %v1344
    %v1346 = vpop.f32.mrb[0].mxu0
    %v1347 = vadd.f32 %v1090, %v1346
    %1348 = vmatprep.mubr.f32.mxu0 %v750
    %1349 = vmatmul.mubr.f32.gmra.mrb[0].mxu0 %v749
    %v1350 = vpop.f32.mrb[0].mxu0
    %v1351 = vadd.f32 %v1094, %v1350
    %v1352 = vpop.f32.mrb[0].mxu0
    %v1353 = vadd.f32 %v1096, %v1352
    %1354 = vmatprep.mubr.f32.mxu0 %v754
    %1355 = vmatmul.mubr.f32.gmra.mrb[0].mxu0 %v753
    %v1356 = vpop.f32.mrb[0].mxu0
    %v1357 = vadd.f32 %v1100, %v1356
    %v1358 = vpop.f32.mrb[0].mxu0
    %v1359 = vadd.f32 %v1102, %v1358
    %1360 = vmatprep.mubr.f32.mxu0 %v758
    %1361 = vmatmul.mubr.f32.gmra.mrb[0].mxu0 %v757
    %v1362 = vpop.f32.mrb[0].mxu0
    %v1363 = vadd.f32 %v1106, %v1362
    %v1364 = vpop.f32.mrb[0].mxu0
    %v1365 = vadd.f32 %v1108, %v1364
    %1366 = vmatprep.mubr.f32.mxu0 %v762
    %1367 = vmatmul.mubr.f32.gmra.mrb[0].mxu0 %v761
    %v1368 = vpop.f32.mrb[0].mxu0
    %v1369 = vadd.f32 %v1112, %v1368
    %v1370 = vpop.f32.mrb[0].mxu0
    %v1371 = vadd.f32 %v1114, %v1370
    %1372 = vmatprep.mubr.f32.mxu0 %v766
    %1373 = vmatmul.mubr.f32.gmra.mrb[0].mxu0 %v765
    %v1374 = vpop.f32.mrb[0].mxu0
    %v1375 = vadd.f32 %v1118, %v1374
    %v1376 = vpop.f32.mrb[0].mxu0
    %v1377 = vadd.f32 %v1120, %v1376
    %1378 = vmatprep.mubr.f32.mxu0 %v770
    %1379 = vmatmul.mubr.f32.gmra.mrb[0].mxu0 %v769
    %v1380 = vpop.f32.mrb[0].mxu0
    %v1381 = vadd.f32 %v1124, %v1380
    %v1382 = vpop.f32.mrb[0].mxu0
    %v1383 = vadd.f32 %v1126, %v1382
    %1384 = vmatprep.mubr.f32.mxu0 %v774
    %1385 = vmatmul.mubr.f32.gmra.mrb[0].mxu0 %v773
    %v1386 = vpop.f32.mrb[0].mxu0
    %v1387 = vadd.f32 %v1130, %v1386
    %v1388 = vpop.f32.mrb[0].mxu0
    %v1389 = vadd.f32 %v1132, %v1388
    %1390 = vmatprep.mubr.f32.mxu0 %v778
    %1391 = vmatmul.mubr.f32.gmra.mrb[0].mxu0 %v777
    %v1392 = vpop.f32.mrb[0].mxu0
    %v1393 = vadd.f32 %v1136, %v1392
    %v1394 = vpop.f32.mrb[0].mxu0
    %v1395 = vadd.f32 %v1138, %v1394
    %1396 = vmatprep.mubr.f32.mxu0 %v782
    %1397 = vmatmul.mubr.f32.gmra.mrb[0].mxu0 %v781
    %v1398 = vpop.f32.mrb[0].mxu0
    %v1399 = vadd.f32 %v1142, %v1398
    %v1400 = vpop.f32.mrb[0].mxu0
    %v1401 = vadd.f32 %v1144, %v1400
    %1402 = vmatprep.mubr.f32.mxu0 %v786
    %1403 = vmatmul.mubr.f32.gmra.mrb[0].mxu0 %v785
    %v1404 = vpop.f32.mrb[0].mxu0
    %v1405 = vadd.f32 %v1148, %v1404
    %v1406 = vpop.f32.mrb[0].mxu0
    %v1407 = vadd.f32 %v1150, %v1406
    %1408 = vmatprep.mubr.f32.mxu0 %v790
    %1409 = vmatmul.mubr.f32.gmra.mrb[0].mxu0 %v789
    %v1410 = vpop.f32.mrb[0].mxu0
    %v1411 = vadd.f32 %v1154, %v1410
    %v1412 = vpop.f32.mrb[0].mxu0
    %v1413 = vadd.f32 %v1156, %v1412
    %1414 = vmatprep.mubr.f32.mxu0 %v794
    %1415 = vmatmul.mubr.f32.gmra.mrb[0].mxu0 %v793
    %v1416 = vpop.f32.mrb[0].mxu0
    %v1417 = vadd.f32 %v1160, %v1416
    %v1418 = vpop.f32.mrb[0].mxu0
    %v1419 = vadd.f32 %v1162, %v1418
    %1420 = vmatprep.mubr.f32.mxu0 %v798
    %1421 = vmatmul.mubr.f32.gmra.mrb[0].mxu0 %v797
    %v1422 = vpop.f32.mrb[0].mxu0
    %v1423 = vadd.f32 %v1166, %v1422
    %v1424 = vpop.f32.mrb[0].mxu0
    %v1425 = vadd.f32 %v1168, %v1424
    %1426 = vmatprep.mubr.f32.mxu0 %v802
    %1427 = vmatmul.mubr.f32.gmra.mrb[0].mxu0 %v801
    %v1428 = vpop.f32.mrb[0].mxu0
    %v1429 = vadd.f32 %v1172, %v1428
    %v1430 = vpop.f32.mrb[0].mxu0
    %v1431 = vadd.f32 %v1174, %v1430
    %1432 = vmatprep.mubr.f32.mxu0 %v806
    %1433 = vmatmul.mubr.f32.gmra.mrb[0].mxu0 %v805
    %v1434 = vpop.f32.mrb[0].mxu0
    %v1435 = vadd.f32 %v1178, %v1434
    %v1436 = vpop.f32.mrb[0].mxu0
    %v1437 = vadd.f32 %v1180, %v1436
    %1438 = vmatprep.mubr.f32.mxu0 %v810
    %1439 = vmatmul.mubr.f32.gmra.mrb[0].mxu0 %v809
    %v1440 = vpop.f32.mrb[0].mxu0
    %v1441 = vadd.f32 %v1184, %v1440
    %v1442 = vpop.f32.mrb[0].mxu0
    %v1443 = vadd.f32 %v1186, %v1442
    %1444 = vmatprep.mubr.f32.mxu0 %v814
    %1445 = vmatmul.mubr.f32.gmra.mrb[0].mxu0 %v813
    %v1446 = vpop.f32.mrb[0].mxu0
    %v1447 = vadd.f32 %v1190, %v1446
    %v1448 = vpop.f32.mrb[0].mxu0
    %v1449 = vadd.f32 %v1192, %v1448
    %1450 = vmatprep.mubr.f32.mxu0 %v818
    %1451 = vmatmul.mubr.f32.gmra.mrb[0].mxu0 %v817
    %v1452 = vpop.f32.mrb[0].mxu0
    %v1453 = vadd.f32 %v1196, %v1452
    %v1454 = vpop.f32.mrb[0].mxu0
    %v1455 = vadd.f32 %v1198, %v1454
    %1456 = vmatprep.mubr.f32.mxu0 %v822
    %1457 = vmatmul.mubr.f32.gmra.mrb[0].mxu0 %v821
    %v1458 = vpop.f32.mrb[0].mxu0
    %v1459 = vadd.f32 %v1202, %v1458
    %v1460 = vpop.f32.mrb[0].mxu0
    %v1461 = vadd.f32 %v1204, %v1460
    %1462 = vmatprep.mubr.f32.mxu0 %v826
    %1463 = vmatmul.mubr.f32.gmra.mrb[0].mxu0 %v825
    %v1464 = vpop.f32.mrb[0].mxu0
    %v1465 = vadd.f32 %v1208, %v1464
    %v1466 = vpop.f32.mrb[0].mxu0
    %v1467 = vadd.f32 %v1210, %v1466
    %1468 = vmatprep.mubr.f32.mxu0 %v830
    %1469 = vmatmul.mubr.f32.gmra.mrb[0].mxu0 %v829
    %v1470 = vpop.f32.mrb[0].mxu0
    %v1471 = vadd.f32 %v1214, %v1470
    %v1472 = vpop.f32.mrb[0].mxu0
    %v1473 = vadd.f32 %v1216, %v1472
    %1474 = vmatprep.mubr.f32.mxu0 %v834
    %1475 = vmatmul.mubr.f32.gmra.mrb[0].mxu0 %v833
    %v1476 = vpop.f32.mrb[0].mxu0
    %v1477 = vadd.f32 %v1220, %v1476
    %v1478 = vpop.f32.mrb[0].mxu0
    %v1479 = vadd.f32 %v1222, %v1478
    %1480 = vmatprep.mubr.f32.mxu0 %v838
    %1481 = vmatmul.mubr.f32.gmra.mrb[0].mxu0 %v837
    %v1482 = vpop.f32.mrb[0].mxu0
    %v1483 = vadd.f32 %v1226, %v1482
    %v1484 = vpop.f32.mrb[0].mxu0
    %v1485 = vadd.f32 %v1228, %v1484
    %1486 = vmatprep.mubr.f32.mxu0 %v842
    %1487 = vmatmul.mubr.f32.gmra.mrb[0].mxu0 %v841
    %v1488 = vpop.f32.mrb[0].mxu0
    %v1489 = vadd.f32 %v1232, %v1488
    %v1490 = vpop.f32.mrb[0].mxu0
    %v1491 = vadd.f32 %v1234, %v1490
    %1492 = vmatprep.mubr.f32.mxu0 %v846
    %1493 = vmatmul.mubr.f32.gmra.mrb[0].mxu0 %v845
    %v1494 = vpop.f32.mrb[0].mxu0
    %v1495 = vadd.f32 %v1238, %v1494
    %v1496 = vpop.f32.mrb[0].mxu0
    %v1497 = vadd.f32 %v1240, %v1496
    %1498 = vmatprep.mubr.f32.mxu0 %v850
    %1499 = vmatmul.mubr.f32.gmra.mrb[0].mxu0 %v849
    %v1500 = vpop.f32.mrb[0].mxu0
    %v1501 = vadd.f32 %v1244, %v1500
    %v1502 = vpop.f32.mrb[0].mxu0
    %v1503 = vadd.f32 %v1246, %v1502
    %1504 = vdwg.mxu0
    %v1505 = vmax.f32 %v1315, 0.0
    %v1506 = vmax.f32 %v1317, 0.0
    %v1507 = vmax.f32 %v1321, 0.0
    %v1508 = vmax.f32 %v1323, 0.0
    %v1509 = vmax.f32 %v1327, 0.0
    %v1510 = vmax.f32 %v1329, 0.0
    %v1511 = vmax.f32 %v1333, 0.0
    %v1512 = vmax.f32 %v1335, 0.0
    %v1513 = vmax.f32 %v1339, 0.0
    %v1514 = vmax.f32 %v1341, 0.0
    %v1515 = vmax.f32 %v1345, 0.0
    %v1516 = vmax.f32 %v1347, 0.0
    %v1517 = vmax.f32 %v1351, 0.0
    %v1518 = vmax.f32 %v1353, 0.0
    %v1519 = vmax.f32 %v1357, 0.0
    %v1520 = vmax.f32 %v1359, 0.0
    %v1521 = vmax.f32 %v1363, 0.0
    %v1522 = vmax.f32 %v1365, 0.0
    %v1523 = vmax.f32 %v1369, 0.0
    %v1524 = vmax.f32 %v1371, 0.0
    %v1525 = vmax.f32 %v1375, 0.0
    %v1526 = vmax.f32 %v1377, 0.0
    %v1527 = vmax.f32 %v1381, 0.0
    %v1528 = vmax.f32 %v1383, 0.0
    %v1529 = vmax.f32 %v1387, 0.0
    %v1530 = vmax.f32 %v1389, 0.0
    %v1531 = vmax.f32 %v1393, 0.0
    %v1532 = vmax.f32 %v1395, 0.0
    %v1533 = vmax.f32 %v1399, 0.0
    %v1534 = vmax.f32 %v1401, 0.0
    %v1535 = vmax.f32 %v1405, 0.0
    %v1536 = vmax.f32 %v1407, 0.0
    %v1537 = vmax.f32 %v1411, 0.0
    %v1538 = vmax.f32 %v1413, 0.0
    %v1539 = vmax.f32 %v1417, 0.0
    %v1540 = vmax.f32 %v1419, 0.0
    %v1541 = vmax.f32 %v1423, 0.0
    %v1542 = vmax.f32 %v1425, 0.0
    %v1543 = vmax.f32 %v1429, 0.0
    %v1544 = vmax.f32 %v1431, 0.0
    %v1545 = vmax.f32 %v1435, 0.0
    %v1546 = vmax.f32 %v1437, 0.0
    %v1547 = vmax.f32 %v1441, 0.0
    %v1548 = vmax.f32 %v1443, 0.0
    %v1549 = vmax.f32 %v1447, 0.0
    %v1550 = vmax.f32 %v1449, 0.0
    %v1551 = vmax.f32 %v1453, 0.0
    %v1552 = vmax.f32 %v1455, 0.0
    %v1553 = vmax.f32 %v1459, 0.0
    %v1554 = vmax.f32 %v1461, 0.0
    %v1555 = vmax.f32 %v1465, 0.0
    %v1556 = vmax.f32 %v1467, 0.0
    %v1557 = vmax.f32 %v1471, 0.0
    %v1558 = vmax.f32 %v1473, 0.0
    %v1559 = vmax.f32 %v1477, 0.0
    %v1560 = vmax.f32 %v1479, 0.0
    %v1561 = vmax.f32 %v1483, 0.0
    %v1562 = vmax.f32 %v1485, 0.0
    %v1563 = vmax.f32 %v1489, 0.0
    %v1564 = vmax.f32 %v1491, 0.0
    %v1565 = vmax.f32 %v1495, 0.0
    %v1566 = vmax.f32 %v1497, 0.0
    %v1567 = vmax.f32 %v1501, 0.0
    %v1568 = vmax.f32 %v1503, 0.0
    %v1569 = vld [vmem:[%s5] sm:$0x3]
    %s1570 = sld [smem:[#allocation2]]
    %v1571 = vstv %s1570
    %v1573 = vlaneseq
    %v1574 = vshrl.u32 %v1573, 7
    %v1575 = vsub.s32 0, %v1574
    %v1576 = vrot.slane %v1569, %v1575
    %v1577 = vlaneseq
    %v1578 = vshrl.u32 %v1577, 7
    %v1579 = vsub.s32 1, %v1578
    %v1580 = vrot.slane %v1569, %v1579
    %1583 = vmatprep.subr.mxu0 %v1506
    %1584 = vmatpush1.xpose.msra.mxu0 %v1505
    %1585 = vmatprep.subr.mxu0 %v1508
    %1586 = vmatpush1.xpose.msra.mxu0 %v1507
    %1587 = vmatprep.subr.mxu0 %v1510
    %1588 = vmatpush1.xpose.msra.mxu0 %v1509
    %1589 = vmatprep.subr.mxu0 %v1512
    %1590 = vmatpush1.xpose.msra.mxu0 %v1511
    %1591 = vmatprep.subr.mxu0 %v1514
    %1592 = vmatpush1.xpose.msra.mxu0 %v1513
    %1593 = vmatprep.subr.mxu0 %v1516
    %1594 = vmatpush1.xpose.msra.mxu0 %v1515
    %1595 = vmatprep.subr.mxu0 %v1518
    %1596 = vmatpush1.xpose.msra.mxu0 %v1517
    %1597 = vmatprep.subr.mxu0 %v1520
    %1598 = vmatpush1.xpose.msra.mxu0 %v1519
    %1599 = vmatprep.subr.mxu0 %v1522
    %1600 = vmatpush1.xpose.msra.mxu0 %v1521
    %1601 = vmatprep.subr.mxu0 %v1524
    %1602 = vmatpush1.xpose.msra.mxu0 %v1523
    %1603 = vmatprep.subr.mxu0 %v1526
    %1604 = vmatpush1.xpose.msra.mxu0 %v1525
    %1605 = vmatprep.subr.mxu0 %v1528
    %1606 = vmatpush1.xpose.msra.mxu0 %v1527
    %1607 = vmatprep.subr.mxu0 %v1530
    %1608 = vmatpush1.xpose.msra.mxu0 %v1529
    %1609 = vmatprep.subr.mxu0 %v1532
    %1610 = vmatpush1.xpose.msra.mxu0 %v1531
    %1611 = vmatprep.subr.mxu0 %v1534
    %1612 = vmatpush1.xpose.msra.mxu0 %v1533
    %1613 = vmatprep.subr.mxu0 %v1536
    %1614 = vmatpush1.xpose.msra.mxu0 %v1535
    %1615 = vmatprep.subr.mxu0 %v1538
    %1616 = vmatpush1.xpose.msra.mxu0 %v1537
    %1617 = vmatprep.subr.mxu0 %v1540
    %1618 = vmatpush1.xpose.msra.mxu0 %v1539
    %1619 = vmatprep.subr.mxu0 %v1542
    %1620 = vmatpush1.xpose.msra.mxu0 %v1541
    %1621 = vmatprep.subr.mxu0 %v1544
    %1622 = vmatpush1.xpose.msra.mxu0 %v1543
    %1623 = vmatprep.subr.mxu0 %v1546
    %1624 = vmatpush1.xpose.msra.mxu0 %v1545
    %1625 = vmatprep.subr.mxu0 %v1548
    %1626 = vmatpush1.xpose.msra.mxu0 %v1547
    %1627 = vmatprep.subr.mxu0 %v1550
    %1628 = vmatpush1.xpose.msra.mxu0 %v1549
    %1629 = vmatprep.subr.mxu0 %v1552
    %1630 = vmatpush1.xpose.msra.mxu0 %v1551
    %1631 = vmatprep.subr.mxu0 %v1554
    %1632 = vmatpush1.xpose.msra.mxu0 %v1553
    %1633 = vmatprep.subr.mxu0 %v1556
    %1634 = vmatpush1.xpose.msra.mxu0 %v1555
    %1635 = vmatprep.subr.mxu0 %v1558
    %1636 = vmatpush1.xpose.msra.mxu0 %v1557
    %1637 = vmatprep.subr.mxu0 %v1560
    %1638 = vmatpush1.xpose.msra.mxu0 %v1559
    %1639 = vmatprep.subr.mxu0 %v1562
    %1640 = vmatpush1.xpose.msra.mxu0 %v1561
    %1641 = vmatprep.subr.mxu0 %v1564
    %1642 = vmatpush1.xpose.msra.mxu0 %v1563
    %1643 = vmatprep.subr.mxu0 %v1566
    %1644 = vmatpush1.xpose.msra.mxu0 %v1565
    %1645 = vmatprep.subr.mxu0 %v1568
    %1646 = vmatpush1.xpose.msra.mxu0 %v1567
    %1647 = vmatprep.mubr.f32.mxu0 %v1580
    %1648 = vmatmul.mubr.f32.gmra.mrb[0].mxu0 %v1576
    %v1649 = vpop.f32.mrb[0].mxu0
    %v1650 = vadd.f32 %v1571, %v1649
    %v1651 = vpop.f32.mrb[0].mxu0
    %v1652 = vadd.f32 %v1571, %v1651
    %1653 = vdwg.mxu0
    %v1656 = vcombine.low %v1650, %v1652
    %v1658 = vunpack.c.l.s4 1966171168
    %v1659 = vunpack.c.0.s8 %v1658
    %v1660 = vlaneseq
    %v1661 = vshrl.u32 %v1660, 7
    %v1662 = vsub.s32 %v1659, %v1661
    %v1663 = vrot.slane %v1656, %v1662
    %v1665 = vunpack.c.l.s4 1966171168
    %v1666 = vunpack.c.0.s8 %v1665
    %v1667 = vlaneseq
    %v1668 = vshrl.u32 %v1667, 7
    %v1669 = vsub.s32 %v1666, %v1668
    %v1670 = vrot.slane %v1663, %v1669
    %v1672 = vlaneseq
    %vm1673 = vcmp.ge.s32.totalorder %v1672, 0
    %vm1674 = vcmp.lt.s32.totalorder %v1672, 256
    %vm1675 = vmand %vm1673, %vm1674
    %1676 = vst.msk [vmem:[#allocation6] sm:$0x3] %vm1675, %v1670
    // Predicated region
    $region34: #{tpu_custom_call.1} parent=1 // pred_check
      _
    $region35: #{tpu_custom_call.1} parent=1 // pred_check_branch
      %1678 = sbr.rel (0) target = $region37
    $region36: #{tpu_custom_call.1} parent=1 // pred_region
      %s1680 = ssub.s32 32, 32
      %1681 = vsyncadd [#allocation5], %s1680
      %s1683 = sshll.u32 [#allocation6], 4
      %s1684 = int_to_ptr.vmem [resolvable:$true] %s1683
      %1686 = dma.vmem_to_hbm [thread:$0]  %s1684, 32, %s7, [#allocation5]
    $region37: #{tpu_custom_call.1} parent=1 // pred_fallthru
      _
    // Predicated region
    $region38: #{tpu_custom_call.1} parent=1 // pred_check
      _
    $region39: #{tpu_custom_call.1} parent=1 // pred_check_branch
      %1688 = sbr.rel (0) target = $region41
    $region40: #{tpu_custom_call.1} parent=1 // pred_region
      %1689 = dma.done [#allocation5], 32
    $region41: #{tpu_custom_call.1} parent=1 // pred_fallthru
      _
    %1690 = vsyncpa [#allocation4], 1
    %1691 = vsyncpa [#allocation5], 1

</llo_original>
